<compile_context>
chip_gen: v7x
topology: tpu7x:2x2x1
jax: 0.10.0
libtpu: 0.0.40
codegen_flags: <defaults>
</compile_context>

<pallas_src>
import jax
import jax.numpy as jnp
from jax.experimental import pallas as pl
from jax.experimental.pallas import tpu as pltpu

_LANE = 128                       # vreg lane width
_MAX_BLOCK_ROWS = 4096            # (4096,128) f32 tile = 2 MiB; 3 arrays x 2 bufs = 12 MiB VMEM
_SMALL_FASTPATH_BYTES = 256 * 1024


def _round_up(a: int, b: int) -> int:
    return ((a + b - 1) // b) * b


def _sublane_rows(dtype) -> int:
    # Minimal second-minor tile granule: 8 (4-byte), 16 (2-byte), 32 (1-byte).
    itemsize = jnp.dtype(dtype).itemsize
    return max(8, 32 // max(int(itemsize), 1))


def _add_kernel(x_ref, r_ref, o_ref):
    # Pure VPU elementwise add on a lane-dense (tb, 128) tile.
    o_ref[...] = x_ref[...] + r_ref[...]


def an_forward(x, res):
    """out = x + res  (forward of PyTorch module AN)."""
    assert x.shape == res.shape, (x.shape, res.shape)
    assert x.dtype == res.dtype, (x.dtype, res.dtype)

    orig_shape = x.shape
    n = 1
    for d in orig_shape:
        n *= int(d)
    itemsize = int(jnp.dtype(x.dtype).itemsize)

    # Small-input fast path: launch + layout plumbing would dominate a
    # one/few-vreg VPU add, so let XLA fuse it.
    if n * itemsize < _SMALL_FASTPATH_BYTES:
        return x + res

    sub = _sublane_rows(x.dtype)
    granule = sub * _LANE              # minimal padding granule (1024 elems for f32)
    n_pad = _round_up(n, granule)
    rows = n_pad // _LANE

    if n_pad == n:
        # Zero-copy path: pure reshape (contiguous collapse), no pad / no slice.
        xf = jnp.reshape(x, (rows, _LANE))
        rf = jnp.reshape(res, (rows, _LANE))
    else:
        pad = n_pad - n                # < granule elements of padding, minimal traffic
        xf = jnp.pad(jnp.ravel(x), (0, pad)).reshape(rows, _LANE)
        rf = jnp.pad(jnp.ravel(res), (0, pad)).reshape(rows, _LANE)

    # Tile rows: as large as comfortably fits default scoped VMEM, but capped at
    # ceil(rows/2) so the "parallel" grid axis has >= 2 blocks (both v7x TCs work).
    tb = min(_MAX_BLOCK_ROWS, _round_up(pl.cdiv(rows, 2), sub))
    tb = max(tb, sub)
    grid = pl.cdiv(rows, tb)           # final block may be partial; Pallas masks OOB

    spec = pl.BlockSpec((tb, _LANE), lambda i: (i, 0))

    out = pl.pallas_call(
        _add_kernel,
        out_shape=jax.ShapeDtypeStruct((rows, _LANE), x.dtype),
        grid=(grid,),
        in_specs=[spec, spec],
        out_specs=spec,
        compiler_params=pltpu.CompilerParams(
            dimension_semantics=("parallel",)),  # shard across v7x's 2 TensorCores
    )(xf, rf)

    if n_pad == n:
        return jnp.reshape(out, orig_shape)
    return jnp.ravel(out)[:n].reshape(orig_shape)


if __name__ == "__main__":
    key = jax.random.PRNGKey(0)
    k1, k2, k3, k4, k5, k6 = jax.random.split(key, 6)

    # Module-scale small shape (input_len_num=32): goes through the fused-add
    # fast path (a pallas launch would only add overhead here).
    x0 = jax.random.normal(k1, (8, 32), dtype=jnp.float32)
    r0 = jax.random.normal(k2, (8, 32), dtype=jnp.float32)
    o0 = jax.block_until_ready(an_forward(x0, r0))
    assert o0.shape == x0.shape
    assert jnp.allclose(o0, x0 + r0, atol=1e-6, rtol=1e-6), "mismatch (small fast path)"

    # Large contiguous case: zero-copy reshape path, 2-block parallel grid,
    # exercises the Pallas kernel proper.
    x1 = jax.random.normal(k3, (8, 3, 128, 257), dtype=jnp.float32)
    r1 = jax.random.normal(k4, (8, 3, 128, 257), dtype=jnp.float32)
    o1 = jax.block_until_ready(an_forward(x1, r1))
    assert o1.shape == x1.shape
    assert jnp.allclose(o1, x1 + r1, atol=1e-6, rtol=1e-6), "mismatch (large contiguous)"

    # Ragged case: exercises minimal-granule padding + partial final block masking.
    x2 = jax.random.normal(k5, (5, 7, 33, 129), dtype=jnp.float32)
    r2 = jax.random.normal(k6, (5, 7, 33, 129), dtype=jnp.float32)
    o2 = jax.block_until_ready(an_forward(x2, r2))
    assert o2.shape == x2.shape
    assert jnp.allclose(o2, x2 + r2, atol=1e-6, rtol=1e-6), "mismatch (ragged padded)"

    print("KERNEL_OK")
</pallas_src>

<mosaic_0001>
module attributes {stable_mosaic.version = 11 : i64} {
  func.func @_add_kernel(%arg0: i32, %arg1: memref<3088x128xf32, #tpu.memory_space<vmem>>, %arg2: memref<3088x128xf32, #tpu.memory_space<vmem>>, %arg3: memref<3088x128xf32, #tpu.memory_space<vmem>>) attributes {dimension_semantics = [#tpu.dimension_semantics<parallel>], iteration_bounds = array<i64: 2>, scalar_prefetch = 0 : i64, scratch_operands = 0 : i64, tpu.core_type = #tpu.core_type<tc>, window_params = [{transform_indices = @transform_0, window_bounds = array<i64: 3088, 128>}, {transform_indices = @transform_1, window_bounds = array<i64: 3088, 128>}, {transform_indices = @transform_2, window_bounds = array<i64: 3088, 128>}]} {
    %c0 = arith.constant 0 : index
    %c0_0 = arith.constant 0 : index
    %0 = vector.load %arg1[%c0, %c0_0] : memref<3088x128xf32, #tpu.memory_space<vmem>>, vector<3088x128xf32>
    %c0_1 = arith.constant 0 : index
    %c0_2 = arith.constant 0 : index
    %1 = vector.load %arg2[%c0_1, %c0_2] : memref<3088x128xf32, #tpu.memory_space<vmem>>, vector<3088x128xf32>
    %2 = arith.addf %0, %1 : vector<3088x128xf32>
    %c0_3 = arith.constant 0 : index
    %c0_4 = arith.constant 0 : index
    %3 = vector.load %arg3[%c0_3, %c0_4] : memref<3088x128xf32, #tpu.memory_space<vmem>>, vector<3088x128xf32>
    tpu.vector_store %arg3[%c0_3, %c0_4], %2 {strides = array<i32>} : memref<3088x128xf32, #tpu.memory_space<vmem>>, vector<3088x128xf32>,
    return
  }
  func.func @transform_0(%arg0: i32) -> (i32, i32) {
    %c0_i32 = arith.constant 0 : i32
    %c0_i32_0 = arith.constant 0 : i32
    return %arg0, %c0_i32 : i32, i32
  }
  func.func @transform_1(%arg0: i32) -> (i32, i32) {
    %c0_i32 = arith.constant 0 : i32
    %c0_i32_0 = arith.constant 0 : i32
    return %arg0, %c0_i32 : i32, i32
  }
  func.func @transform_2(%arg0: i32) -> (i32, i32) {
    %c0_i32 = arith.constant 0 : i32
    %c0_i32_0 = arith.constant 0 : i32
    return %arg0, %c0_i32 : i32, i32
  }
}

</mosaic_0001>

<llo_original>
// kernel: tpu_custom_call.1
$region0: #{tpu_custom_call.1}
  #allocation0 [shape = 'u32[]', space=smem, size = 0x4, offset = 0x4, fixed_abs, tag = 'smem constant byte address 0x4 - core index']
  #allocation1 [shape = 'u32[144,128]{1,0:T(1,128)}', space=vmem, size = 0x12000, scoped, tag = 'internal scratch']
  %s0 = inlined_call_operand.hbm [shape: f32[6168,128], index: 0, kind: input, shape index: {}]
  %s1 = inlined_call_operand.hbm [shape: f32[6168,128], index: 1, kind: input, shape index: {}]
  %s2 = inlined_call_operand.hbm [shape: f32[6168,128], index: 2, kind: output, shape index: {}]
  %s3 = sld [smem:[#allocation0]]
  $region49: #{tpu_custom_call.1} parent=0
    _
  %s5 = ssub.s32 1, %s3
  %s6 = scalar_select 0, %s5, %s3
  $region1: #{tpu_custom_call.1} parent=0
    #allocation2 [shape = 'u8[3162112]{0}', space=vmem, size = 0x304000, scoped, tag = 'input window, operand 0']
    #allocation3 [shape = 's32[2]{0}', space=sflag, size = 0x8, scoped, tag = 'scoped memory for tpu_custom_call.1']
    #allocation4 [shape = 's32[2]{0}', space=sflag, size = 0x8, scoped, tag = 'scoped memory for tpu_custom_call.1']
    #allocation5 [shape = 'u8[3162112]{0}', space=vmem, size = 0x304000, scoped, tag = 'input window, operand 1']
    #allocation6 [shape = 's32[2]{0}', space=sflag, size = 0x8, scoped, tag = 'scoped memory for tpu_custom_call.1']
    #allocation7 [shape = 'u8[3162112]{0}', space=vmem, size = 0x304000, scoped, tag = 'output window, operand 0']
    %7 = vsyncpa [#allocation3], 0
    %s8 = scalar_lea.sflag [#allocation3], 1
    %9 = vsyncpa %s8, 0
    %10 = vsyncpa [#allocation6], 0
    %s11 = scalar_lea.sflag [#allocation6], 1
    %12 = vsyncpa %s11, 0
    %13 = vsyncpa [#allocation4], 0
    %s14 = scalar_lea.sflag [#allocation4], 1
    %15 = vsyncpa %s14, 0
    loop: start=0, step=1, limit=4
    $region2: #{tpu_custom_call.1} parent=1 // loop_pre_header
      _
    $region3: #{tpu_custom_call.1} parent=1 // loop_header
      %s17 = sphi 0, %s21
      %p18 = scmp.ge.s32.totalorder %s17, 4
      %s27 = sphi 0, %s29
      %s30 = sphi 0, %s27
      %s31 = sphi 0, %s30
      %s47 = sphi 0, %s31
      %s53 = sphi 0, %s55
      %s56 = sphi 0, %s53
      %s57 = sphi 0, %s56
      %s73 = sphi 0, %s57
      %s79 = sphi 0, %s81
      %s82 = sphi 0, %s79
      %s83 = sphi 0, %s82
      %s99 = sphi 0, %s83
    $region4: #{tpu_custom_call.1} parent=1 // loop_header_branch
      %20 = sbr.rel (%p18) target = $region8
    $region5: #{tpu_custom_call.1} parent=1 // loop_body
      %s22 = ssub.s32 %s17, 1
      %s23 = ssub.s32 %s17, 2
      %s24 = sadd.s32 %s17, 1
      %s25 = ssub.s32 %s17, %s24
      %p26 = scmp.eq.s32.totalorder %s25, 0
      %s28 = sadd.s32 %s27, 1
      %s29 = scalar_select %p26, %s27, %s28
      %p32 = pneg %p26
      %p33 = scmp.eq.s32.totalorder %s17, 1
      %p34 = por %p32, %p33
      %p35 = scmp.ne.s32.totalorder %s27, %s30
      %p36 = scmp.eq.s32.totalorder %s17, 0
      %p37 = por %p35, %p36
      %p38 = scmp.ne.s32.totalorder %s27, %s30
      %p39 = scmp.eq.s32.totalorder %s22, 1
      %p40 = por %p38, %p39
      %p41 = scmp.ne.s32.totalorder %s30, %s31
      %p42 = scmp.eq.s32.totalorder %s22, 0
      %p43 = por %p41, %p42
      %p44 = scmp.ne.s32.totalorder %s30, %s31
      %p45 = scmp.eq.s32.totalorder %s23, 1
      %p46 = por %p44, %p45
      %p48 = scmp.ne.s32.totalorder %s31, %s47
      %p49 = scmp.eq.s32.totalorder %s23, 0
      %p50 = por %p48, %p49
      %s51 = ssub.s32 %s17, %s24
      %p52 = scmp.eq.s32.totalorder %s51, 0
      %s54 = sadd.s32 %s53, 1
      %s55 = scalar_select %p52, %s53, %s54
      %p58 = pneg %p52
      %p59 = scmp.eq.s32.totalorder %s17, 1
      %p60 = por %p58, %p59
      %p61 = scmp.ne.s32.totalorder %s53, %s56
      %p62 = scmp.eq.s32.totalorder %s17, 0
      %p63 = por %p61, %p62
      %p64 = scmp.ne.s32.totalorder %s53, %s56
      %p65 = scmp.eq.s32.totalorder %s22, 1
      %p66 = por %p64, %p65
      %p67 = scmp.ne.s32.totalorder %s56, %s57
      %p68 = scmp.eq.s32.totalorder %s22, 0
      %p69 = por %p67, %p68
      %p70 = scmp.ne.s32.totalorder %s56, %s57
      %p71 = scmp.eq.s32.totalorder %s23, 1
      %p72 = por %p70, %p71
      %p74 = scmp.ne.s32.totalorder %s57, %s73
      %p75 = scmp.eq.s32.totalorder %s23, 0
      %p76 = por %p74, %p75
      %s77 = ssub.s32 %s17, %s24
      %p78 = scmp.eq.s32.totalorder %s77, 0
      %s80 = sadd.s32 %s79, 1
      %s81 = scalar_select %p78, %s79, %s80
      %p84 = pneg %p78
      %p85 = scmp.eq.s32.totalorder %s17, 1
      %p86 = por %p84, %p85
      %p87 = scmp.ne.s32.totalorder %s79, %s82
      %p88 = scmp.eq.s32.totalorder %s17, 0
      %p89 = por %p87, %p88
      %p90 = scmp.ne.s32.totalorder %s79, %s82
      %p91 = scmp.eq.s32.totalorder %s22, 1
      %p92 = por %p90, %p91
      %p93 = scmp.ne.s32.totalorder %s82, %s83
      %p94 = scmp.eq.s32.totalorder %s22, 0
      %p95 = por %p93, %p94
      %p96 = scmp.ne.s32.totalorder %s82, %s83
      %p97 = scmp.eq.s32.totalorder %s23, 1
      %p98 = por %p96, %p97
      %p100 = scmp.ne.s32.totalorder %s83, %s99
      %p101 = scmp.eq.s32.totalorder %s23, 0
      %p102 = por %p100, %p101
      %p103 = scmp.le.s32.totalorder 1, %s17
      %p104 = scmp.lt.s32.totalorder %s17, 3
      %p105 = pnand %p103, %p104
      %p106 = pneg %p105
      // Predicated region
      $region9: #{tpu_custom_call.1} parent=5 // pred_check
        _
      $region10: #{tpu_custom_call.1} parent=5 // pred_check_branch
        %108 = sbr.rel (%p105) target = $region12
      $region11: #{tpu_custom_call.1} parent=5 // pred_region
        %s109 = ssub.s32 %s17, 1
      $region12: #{tpu_custom_call.1} parent=5 // pred_fallthru
        _
      %p110 = scmp.lt.s32.totalorder %s17, 2
      // Predicated region
      $region13: #{tpu_custom_call.1} parent=5 // pred_check
        %p111 = pneg %p110
      $region14: #{tpu_custom_call.1} parent=5 // pred_check_branch
        %113 = sbr.rel (%p111) target = $region16
      $region15: #{tpu_custom_call.1} parent=5 // pred_region
        // Predicated region
        $region17: #{tpu_custom_call.1} parent=15 // pred_check
          %p114 = pneg %p37
        $region18: #{tpu_custom_call.1} parent=15 // pred_check_branch
          %116 = sbr.rel (%p114) target = $region20
        $region19: #{tpu_custom_call.1} parent=15 // pred_region
          %s117 = sand.u32 %s27, 1
          %s118 = scalar_lea.sflag [#allocation3], %s117
          %s119 = sand.u32 %s27, 1
          %s120 = smul.addr %s119, 3088
          %s121 = scalar_lea.vmem [#allocation2], %s120
          %s122 = smul.u32 386, %s17
          %s123 = ssub.s32 771, %s122
          %p124 = scmp.lt.s32.totalorder %s123, 386
          %s125 = scalar_select %p124, %s123, 386
          %s126 = smul.u32 128, %s125
          %s128 = ssub.s32 49408, %s126
          %129 = vsyncadd %s118, %s128
          %p130 = scmp.ne.s32.totalorder 0, %s126
          %s131 = smul.addr %s122, 128
          %s132 = scalar_lea.hbm %s0, %s131
          %s133 = smul.u32 8, %s125
          %s134 = sshll.u32 %s121, 4
          %s135 = int_to_ptr.vmem [resolvable:$true] %s134
          %s136 = sshll.u32 %s133, 4
          %140 = dma.hbm_to_vmem [thread:$0]  (%p130), %s132, %s136, %s135, %s118, 128, 128, 8
        $region20: #{tpu_custom_call.1} parent=15 // pred_fallthru
          _
        // Predicated region
        $region21: #{tpu_custom_call.1} parent=15 // pred_check
          %p141 = pneg %p63
        $region22: #{tpu_custom_call.1} parent=15 // pred_check_branch
          %143 = sbr.rel (%p141) target = $region24
        $region23: #{tpu_custom_call.1} parent=15 // pred_region
          %s144 = sand.u32 %s53, 1
          %s145 = scalar_lea.sflag [#allocation6], %s144
          %s146 = sand.u32 %s53, 1
          %s147 = smul.addr %s146, 3088
          %s148 = scalar_lea.vmem [#allocation5], %s147
          %s149 = smul.u32 386, %s17
          %s150 = ssub.s32 771, %s149
          %p151 = scmp.lt.s32.totalorder %s150, 386
          %s152 = scalar_select %p151, %s150, 386
          %s153 = smul.u32 128, %s152
          %s155 = ssub.s32 49408, %s153
          %156 = vsyncadd %s145, %s155
          %p157 = scmp.ne.s32.totalorder 0, %s153
          %s158 = smul.addr %s149, 128
          %s159 = scalar_lea.hbm %s1, %s158
          %s160 = smul.u32 8, %s152
          %s161 = sshll.u32 %s148, 4
          %s162 = int_to_ptr.vmem [resolvable:$true] %s161
          %s163 = sshll.u32 %s160, 4
          %167 = dma.hbm_to_vmem [thread:$0]  (%p157), %s159, %s163, %s162, %s145, 128, 128, 8
        $region24: #{tpu_custom_call.1} parent=15 // pred_fallthru
          _
      $region16: #{tpu_custom_call.1} parent=5 // pred_fallthru
        _
      %p168 = scmp.le.s32.totalorder 1, %s17
      %p169 = scmp.lt.s32.totalorder %s17, 3
      %p170 = pnand %p168, %p169
      %p171 = pneg %p170
      // Predicated region
      $region25: #{tpu_custom_call.1} parent=5 // pred_check
        _
      $region26: #{tpu_custom_call.1} parent=5 // pred_check_branch
        %173 = sbr.rel (%p170) target = $region28
      $region27: #{tpu_custom_call.1} parent=5 // pred_region
        %s174 = ssub.s32 %s17, 1
        %s175 = sand.u32 %s30, 1
        %s176 = scalar_lea.sflag [#allocation3], %s175
        %s177 = sand.u32 %s30, 1
        %s178 = smul.addr %s177, 3088
        %s179 = scalar_lea.vmem [#allocation2], %s178
        // Predicated region
        $region29: #{tpu_custom_call.1} parent=27 // pred_check
          %p180 = pneg %p43
        $region30: #{tpu_custom_call.1} parent=27 // pred_check_branch
          %182 = sbr.rel (%p180) target = $region32
        $region31: #{tpu_custom_call.1} parent=27 // pred_region
          %183 = dma.done %s176, 49408
        $region32: #{tpu_custom_call.1} parent=27 // pred_fallthru
          _
        %s184 = sand.u32 %s56, 1
        %s185 = scalar_lea.sflag [#allocation6], %s184
        %s186 = sand.u32 %s56, 1
        %s187 = smul.addr %s186, 3088
        %s188 = scalar_lea.vmem [#allocation5], %s187
        // Predicated region
        $region33: #{tpu_custom_call.1} parent=27 // pred_check
          %p189 = pneg %p69
        $region34: #{tpu_custom_call.1} parent=27 // pred_check_branch
          %191 = sbr.rel (%p189) target = $region36
        $region35: #{tpu_custom_call.1} parent=27 // pred_region
          %192 = dma.done %s185, 49408
        $region36: #{tpu_custom_call.1} parent=27 // pred_fallthru
          _
        %s193 = sand.u32 %s30, 1
        %s194 = scalar_lea.sflag [#allocation3], %s193
        %s195 = sand.u32 %s30, 1
        %s196 = smul.addr %s195, 3088
        %s197 = scalar_lea.vmem [#allocation2], %s196
        %p198 = pneg %p43
        %p199 = pneg %p40
        %s200 = sand.u32 %s56, 1
        %s201 = scalar_lea.sflag [#allocation6], %s200
        %s202 = sand.u32 %s56, 1
        %s203 = smul.addr %s202, 3088
        %s204 = scalar_lea.vmem [#allocation5], %s203
        %p205 = pneg %p69
        %p206 = pneg %p66
        %p207 = pneg %p95
        %p208 = pneg %p92
        %s209 = sand.u32 %s82, 1
        %s210 = scalar_lea.sflag [#allocation4], %s209
        %s211 = sand.u32 %s82, 1
        %s212 = smul.addr %s211, 3088
        %s213 = scalar_lea.vmem [#allocation7], %s212
        %s214 = smul.u32 386, %s22
        %s215 = ssub.s32 771, %s214
        %p216 = scmp.lt.s32.totalorder %s215, 386
        %s217 = scalar_select %p216, %s215, 386
        %s218 = smul.u32 128, %s217
        %s219 = smul.u32 386, %s22
        %s220 = ssub.s32 771, %s219
        %p221 = scmp.lt.s32.totalorder %s220, 386
        %s222 = scalar_select %p221, %s220, 386
        %s223 = smul.u32 128, %s222
        %s224 = smul.u32 386, %s22
        %s225 = ssub.s32 771, %s224
        %p226 = scmp.lt.s32.totalorder %s225, 386
        %s227 = scalar_select %p226, %s225, 386
        %s228 = smul.u32 128, %s227
        %v229 = vld [vmem:[%s179] sm:$0xff]
        %v230 = vld [vmem:[%s179 + $0x8] sm:$0xff]
        %v231 = vld [vmem:[%s179 + $0x10] sm:$0xff]
        %v232 = vld [vmem:[%s179 + $0x18] sm:$0xff]
        %v233 = vld [vmem:[%s179 + $0x20] sm:$0xff]
        %v234 = vld [vmem:[%s179 + $0x28] sm:$0xff]
        %v235 = vld [vmem:[%s179 + $0x30] sm:$0xff]
        %v236 = vld [vmem:[%s179 + $0x38] sm:$0xff]
        %v237 = vld [vmem:[%s179 + $0x40] sm:$0xff]
        %v238 = vld [vmem:[%s179 + $0x48] sm:$0xff]
        %v239 = vld [vmem:[%s179 + $0x50] sm:$0xff]
        %v240 = vld [vmem:[%s179 + $0x58] sm:$0xff]
        %v241 = vld [vmem:[%s179 + $0x60] sm:$0xff]
        %v242 = vld [vmem:[%s179 + $0x68] sm:$0xff]
        %v243 = vld [vmem:[%s179 + $0x70] sm:$0xff]
        %v244 = vld [vmem:[%s179 + $0x78] sm:$0xff]
        %v245 = vld [vmem:[%s179 + $0x80] sm:$0xff]
        %v246 = vld [vmem:[%s179 + $0x88] sm:$0xff]
        %v247 = vld [vmem:[%s179 + $0x90] sm:$0xff]
        %v248 = vld [vmem:[%s179 + $0x98] sm:$0xff]
        %v249 = vld [vmem:[%s179 + $0xa0] sm:$0xff]
        %v250 = vld [vmem:[%s179 + $0xa8] sm:$0xff]
        %v251 = vld [vmem:[%s179 + $0xb0] sm:$0xff]
        %v252 = vld [vmem:[%s179 + $0xb8] sm:$0xff]
        %v253 = vld [vmem:[%s179 + $0xc0] sm:$0xff]
        %v254 = vld [vmem:[%s179 + $0xc8] sm:$0xff]
        %v255 = vld [vmem:[%s179 + $0xd0] sm:$0xff]
        %v256 = vld [vmem:[%s179 + $0xd8] sm:$0xff]
        %v257 = vld [vmem:[%s179 + $0xe0] sm:$0xff]
        %v258 = vld [vmem:[%s179 + $0xe8] sm:$0xff]
        %v259 = vld [vmem:[%s179 + $0xf0] sm:$0xff]
        %v260 = vld [vmem:[%s179 + $0xf8] sm:$0xff]
        %v261 = vld [vmem:[%s179 + $0x100] sm:$0xff]
        %v262 = vld [vmem:[%s179 + $0x108] sm:$0xff]
        %v263 = vld [vmem:[%s179 + $0x110] sm:$0xff]
        %v264 = vld [vmem:[%s179 + $0x118] sm:$0xff]
        %v265 = vld [vmem:[%s179 + $0x120] sm:$0xff]
        %v266 = vld [vmem:[%s179 + $0x128] sm:$0xff]
        %v267 = vld [vmem:[%s179 + $0x130] sm:$0xff]
        %v268 = vld [vmem:[%s179 + $0x138] sm:$0xff]
        %v269 = vld [vmem:[%s179 + $0x140] sm:$0xff]
        %v270 = vld [vmem:[%s179 + $0x148] sm:$0xff]
        %v271 = vld [vmem:[%s179 + $0x150] sm:$0xff]
        %v272 = vld [vmem:[%s179 + $0x158] sm:$0xff]
        %v273 = vld [vmem:[%s179 + $0x160] sm:$0xff]
        %v274 = vld [vmem:[%s179 + $0x168] sm:$0xff]
        %v275 = vld [vmem:[%s179 + $0x170] sm:$0xff]
        %v276 = vld [vmem:[%s179 + $0x178] sm:$0xff]
        %v277 = vld [vmem:[%s179 + $0x180] sm:$0xff]
        %v278 = vld [vmem:[%s179 + $0x188] sm:$0xff]
        %v279 = vld [vmem:[%s179 + $0x190] sm:$0xff]
        %v280 = vld [vmem:[%s179 + $0x198] sm:$0xff]
        %v281 = vld [vmem:[%s179 + $0x1a0] sm:$0xff]
        %v282 = vld [vmem:[%s179 + $0x1a8] sm:$0xff]
        %v283 = vld [vmem:[%s179 + $0x1b0] sm:$0xff]
        %v284 = vld [vmem:[%s179 + $0x1b8] sm:$0xff]
        %v285 = vld [vmem:[%s179 + $0x1c0] sm:$0xff]
        %v286 = vld [vmem:[%s179 + $0x1c8] sm:$0xff]
        %v287 = vld [vmem:[%s179 + $0x1d0] sm:$0xff]
        %v288 = vld [vmem:[%s179 + $0x1d8] sm:$0xff]
        %v289 = vld [vmem:[%s179 + $0x1e0] sm:$0xff]
        %v290 = vld [vmem:[%s179 + $0x1e8] sm:$0xff]
        %v291 = vld [vmem:[%s179 + $0x1f0] sm:$0xff]
        %v292 = vld [vmem:[%s179 + $0x1f8] sm:$0xff]
        %v293 = vld [vmem:[%s179 + $0x200] sm:$0xff]
        %v294 = vld [vmem:[%s179 + $0x208] sm:$0xff]
        %v295 = vld [vmem:[%s179 + $0x210] sm:$0xff]
        %v296 = vld [vmem:[%s179 + $0x218] sm:$0xff]
        %v297 = vld [vmem:[%s179 + $0x220] sm:$0xff]
        %v298 = vld [vmem:[%s179 + $0x228] sm:$0xff]
        %v299 = vld [vmem:[%s179 + $0x230] sm:$0xff]
        %v300 = vld [vmem:[%s179 + $0x238] sm:$0xff]
        %v301 = vld [vmem:[%s179 + $0x240] sm:$0xff]
        %v302 = vld [vmem:[%s179 + $0x248] sm:$0xff]
        %v303 = vld [vmem:[%s179 + $0x250] sm:$0xff]
        %v304 = vld [vmem:[%s179 + $0x258] sm:$0xff]
        %v305 = vld [vmem:[%s179 + $0x260] sm:$0xff]
        %v306 = vld [vmem:[%s179 + $0x268] sm:$0xff]
        %v307 = vld [vmem:[%s179 + $0x270] sm:$0xff]
        %v308 = vld [vmem:[%s179 + $0x278] sm:$0xff]
        %v309 = vld [vmem:[%s179 + $0x280] sm:$0xff]
        %v310 = vld [vmem:[%s179 + $0x288] sm:$0xff]
        %v311 = vld [vmem:[%s179 + $0x290] sm:$0xff]
        %v312 = vld [vmem:[%s179 + $0x298] sm:$0xff]
        %v313 = vld [vmem:[%s179 + $0x2a0] sm:$0xff]
        %v314 = vld [vmem:[%s179 + $0x2a8] sm:$0xff]
        %v315 = vld [vmem:[%s179 + $0x2b0] sm:$0xff]
        %v316 = vld [vmem:[%s179 + $0x2b8] sm:$0xff]
        %v317 = vld [vmem:[%s179 + $0x2c0] sm:$0xff]
        %v318 = vld [vmem:[%s179 + $0x2c8] sm:$0xff]
        %v319 = vld [vmem:[%s179 + $0x2d0] sm:$0xff]
        %v320 = vld [vmem:[%s179 + $0x2d8] sm:$0xff]
        %v321 = vld [vmem:[%s179 + $0x2e0] sm:$0xff]
        %v322 = vld [vmem:[%s179 + $0x2e8] sm:$0xff]
        %v323 = vld [vmem:[%s179 + $0x2f0] sm:$0xff]
        %v324 = vld [vmem:[%s179 + $0x2f8] sm:$0xff]
        %v325 = vld [vmem:[%s179 + $0x300] sm:$0xff]
        %v326 = vld [vmem:[%s179 + $0x308] sm:$0xff]
        %v327 = vld [vmem:[%s179 + $0x310] sm:$0xff]
        %v328 = vld [vmem:[%s179 + $0x318] sm:$0xff]
        %v329 = vld [vmem:[%s179 + $0x320] sm:$0xff]
        %v330 = vld [vmem:[%s179 + $0x328] sm:$0xff]
        %v331 = vld [vmem:[%s179 + $0x330] sm:$0xff]
        %v332 = vld [vmem:[%s179 + $0x338] sm:$0xff]
        %v333 = vld [vmem:[%s179 + $0x340] sm:$0xff]
        %v334 = vld [vmem:[%s179 + $0x348] sm:$0xff]
        %v335 = vld [vmem:[%s179 + $0x350] sm:$0xff]
        %v336 = vld [vmem:[%s179 + $0x358] sm:$0xff]
        %v337 = vld [vmem:[%s179 + $0x360] sm:$0xff]
        %v338 = vld [vmem:[%s179 + $0x368] sm:$0xff]
        %v339 = vld [vmem:[%s179 + $0x370] sm:$0xff]
        %v340 = vld [vmem:[%s179 + $0x378] sm:$0xff]
        %v341 = vld [vmem:[%s179 + $0x380] sm:$0xff]
        %v342 = vld [vmem:[%s179 + $0x388] sm:$0xff]
        %v343 = vld [vmem:[%s179 + $0x390] sm:$0xff]
        %v344 = vld [vmem:[%s179 + $0x398] sm:$0xff]
        %v345 = vld [vmem:[%s179 + $0x3a0] sm:$0xff]
        %v346 = vld [vmem:[%s179 + $0x3a8] sm:$0xff]
        %v347 = vld [vmem:[%s179 + $0x3b0] sm:$0xff]
        %v348 = vld [vmem:[%s179 + $0x3b8] sm:$0xff]
        %v349 = vld [vmem:[%s179 + $0x3c0] sm:$0xff]
        %v350 = vld [vmem:[%s179 + $0x3c8] sm:$0xff]
        %v351 = vld [vmem:[%s179 + $0x3d0] sm:$0xff]
        %v352 = vld [vmem:[%s179 + $0x3d8] sm:$0xff]
        %v353 = vld [vmem:[%s179 + $0x3e0] sm:$0xff]
        %v354 = vld [vmem:[%s179 + $0x3e8] sm:$0xff]
        %v355 = vld [vmem:[%s179 + $0x3f0] sm:$0xff]
        %v356 = vld [vmem:[%s179 + $0x3f8] sm:$0xff]
        %v357 = vld [vmem:[%s179 + $0x400] sm:$0xff]
        %v358 = vld [vmem:[%s179 + $0x408] sm:$0xff]
        %v359 = vld [vmem:[%s179 + $0x410] sm:$0xff]
        %v360 = vld [vmem:[%s179 + $0x418] sm:$0xff]
        %v361 = vld [vmem:[%s179 + $0x420] sm:$0xff]
        %v362 = vld [vmem:[%s179 + $0x428] sm:$0xff]
        %v363 = vld [vmem:[%s179 + $0x430] sm:$0xff]
        %v364 = vld [vmem:[%s179 + $0x438] sm:$0xff]
        %v365 = vld [vmem:[%s179 + $0x440] sm:$0xff]
        %v366 = vld [vmem:[%s179 + $0x448] sm:$0xff]
        %v367 = vld [vmem:[%s179 + $0x450] sm:$0xff]
        %v368 = vld [vmem:[%s179 + $0x458] sm:$0xff]
        %v369 = vld [vmem:[%s179 + $0x460] sm:$0xff]
        %v370 = vld [vmem:[%s179 + $0x468] sm:$0xff]
        %v371 = vld [vmem:[%s179 + $0x470] sm:$0xff]
        %v372 = vld [vmem:[%s179 + $0x478] sm:$0xff]
        %v373 = vld [vmem:[%s179 + $0x480] sm:$0xff]
        %v374 = vld [vmem:[%s179 + $0x488] sm:$0xff]
        %v375 = vld [vmem:[%s179 + $0x490] sm:$0xff]
        %v376 = vld [vmem:[%s179 + $0x498] sm:$0xff]
        %v377 = vld [vmem:[%s179 + $0x4a0] sm:$0xff]
        %v378 = vld [vmem:[%s179 + $0x4a8] sm:$0xff]
        %v379 = vld [vmem:[%s179 + $0x4b0] sm:$0xff]
        %v380 = vld [vmem:[%s179 + $0x4b8] sm:$0xff]
        %v381 = vld [vmem:[%s179 + $0x4c0] sm:$0xff]
        %v382 = vld [vmem:[%s179 + $0x4c8] sm:$0xff]
        %v383 = vld [vmem:[%s179 + $0x4d0] sm:$0xff]
        %v384 = vld [vmem:[%s179 + $0x4d8] sm:$0xff]
        %v385 = vld [vmem:[%s179 + $0x4e0] sm:$0xff]
        %v386 = vld [vmem:[%s179 + $0x4e8] sm:$0xff]
        %v387 = vld [vmem:[%s179 + $0x4f0] sm:$0xff]
        %v388 = vld [vmem:[%s179 + $0x4f8] sm:$0xff]
        %v389 = vld [vmem:[%s179 + $0x500] sm:$0xff]
        %v390 = vld [vmem:[%s179 + $0x508] sm:$0xff]
        %v391 = vld [vmem:[%s179 + $0x510] sm:$0xff]
        %v392 = vld [vmem:[%s179 + $0x518] sm:$0xff]
        %v393 = vld [vmem:[%s179 + $0x520] sm:$0xff]
        %v394 = vld [vmem:[%s179 + $0x528] sm:$0xff]
        %v395 = vld [vmem:[%s179 + $0x530] sm:$0xff]
        %v396 = vld [vmem:[%s179 + $0x538] sm:$0xff]
        %v397 = vld [vmem:[%s179 + $0x540] sm:$0xff]
        %v398 = vld [vmem:[%s179 + $0x548] sm:$0xff]
        %v399 = vld [vmem:[%s179 + $0x550] sm:$0xff]
        %v400 = vld [vmem:[%s179 + $0x558] sm:$0xff]
        %v401 = vld [vmem:[%s179 + $0x560] sm:$0xff]
        %v402 = vld [vmem:[%s179 + $0x568] sm:$0xff]
        %v403 = vld [vmem:[%s179 + $0x570] sm:$0xff]
        %v404 = vld [vmem:[%s179 + $0x578] sm:$0xff]
        %v405 = vld [vmem:[%s179 + $0x580] sm:$0xff]
        %v406 = vld [vmem:[%s179 + $0x588] sm:$0xff]
        %v407 = vld [vmem:[%s179 + $0x590] sm:$0xff]
        %v408 = vld [vmem:[%s179 + $0x598] sm:$0xff]
        %v409 = vld [vmem:[%s179 + $0x5a0] sm:$0xff]
        %v410 = vld [vmem:[%s179 + $0x5a8] sm:$0xff]
        %v411 = vld [vmem:[%s179 + $0x5b0] sm:$0xff]
        %v412 = vld [vmem:[%s179 + $0x5b8] sm:$0xff]
        %v413 = vld [vmem:[%s179 + $0x5c0] sm:$0xff]
        %v414 = vld [vmem:[%s179 + $0x5c8] sm:$0xff]
        %v415 = vld [vmem:[%s179 + $0x5d0] sm:$0xff]
        %v416 = vld [vmem:[%s179 + $0x5d8] sm:$0xff]
        %v417 = vld [vmem:[%s179 + $0x5e0] sm:$0xff]
        %v418 = vld [vmem:[%s179 + $0x5e8] sm:$0xff]
        %v419 = vld [vmem:[%s179 + $0x5f0] sm:$0xff]
        %v420 = vld [vmem:[%s179 + $0x5f8] sm:$0xff]
        %v421 = vld [vmem:[%s179 + $0x600] sm:$0xff]
        %v422 = vld [vmem:[%s179 + $0x608] sm:$0xff]
        %v423 = vld [vmem:[%s179 + $0x610] sm:$0xff]
        %v424 = vld [vmem:[%s179 + $0x618] sm:$0xff]
        %v425 = vld [vmem:[%s179 + $0x620] sm:$0xff]
        %v426 = vld [vmem:[%s179 + $0x628] sm:$0xff]
        %v427 = vld [vmem:[%s179 + $0x630] sm:$0xff]
        %v428 = vld [vmem:[%s179 + $0x638] sm:$0xff]
        %v429 = vld [vmem:[%s179 + $0x640] sm:$0xff]
        %v430 = vld [vmem:[%s179 + $0x648] sm:$0xff]
        %v431 = vld [vmem:[%s179 + $0x650] sm:$0xff]
        %v432 = vld [vmem:[%s179 + $0x658] sm:$0xff]
        %v433 = vld [vmem:[%s179 + $0x660] sm:$0xff]
        %v434 = vld [vmem:[%s179 + $0x668] sm:$0xff]
        %v435 = vld [vmem:[%s179 + $0x670] sm:$0xff]
        %v436 = vld [vmem:[%s179 + $0x678] sm:$0xff]
        %v437 = vld [vmem:[%s179 + $0x680] sm:$0xff]
        %v438 = vld [vmem:[%s179 + $0x688] sm:$0xff]
        %v439 = vld [vmem:[%s179 + $0x690] sm:$0xff]
        %v440 = vld [vmem:[%s179 + $0x698] sm:$0xff]
        %v441 = vld [vmem:[%s179 + $0x6a0] sm:$0xff]
        %v442 = vld [vmem:[%s179 + $0x6a8] sm:$0xff]
        %v443 = vld [vmem:[%s179 + $0x6b0] sm:$0xff]
        %v444 = vld [vmem:[%s179 + $0x6b8] sm:$0xff]
        %v445 = vld [vmem:[%s179 + $0x6c0] sm:$0xff]
        %v446 = vld [vmem:[%s179 + $0x6c8] sm:$0xff]
        %v447 = vld [vmem:[%s179 + $0x6d0] sm:$0xff]
        %v448 = vld [vmem:[%s179 + $0x6d8] sm:$0xff]
        %v449 = vld [vmem:[%s179 + $0x6e0] sm:$0xff]
        %v450 = vld [vmem:[%s179 + $0x6e8] sm:$0xff]
        %v451 = vld [vmem:[%s179 + $0x6f0] sm:$0xff]
        %v452 = vld [vmem:[%s179 + $0x6f8] sm:$0xff]
        %v453 = vld [vmem:[%s179 + $0x700] sm:$0xff]
        %v454 = vld [vmem:[%s179 + $0x708] sm:$0xff]
        %v455 = vld [vmem:[%s179 + $0x710] sm:$0xff]
        %v456 = vld [vmem:[%s179 + $0x718] sm:$0xff]
        %v457 = vld [vmem:[%s179 + $0x720] sm:$0xff]
        %v458 = vld [vmem:[%s179 + $0x728] sm:$0xff]
        %v459 = vld [vmem:[%s179 + $0x730] sm:$0xff]
        %v460 = vld [vmem:[%s179 + $0x738] sm:$0xff]
        %v461 = vld [vmem:[%s179 + $0x740] sm:$0xff]
        %v462 = vld [vmem:[%s179 + $0x748] sm:$0xff]
        %v463 = vld [vmem:[%s179 + $0x750] sm:$0xff]
        %v464 = vld [vmem:[%s179 + $0x758] sm:$0xff]
        %v465 = vld [vmem:[%s179 + $0x760] sm:$0xff]
        %v466 = vld [vmem:[%s179 + $0x768] sm:$0xff]
        %v467 = vld [vmem:[%s179 + $0x770] sm:$0xff]
        %v468 = vld [vmem:[%s179 + $0x778] sm:$0xff]
        %v469 = vld [vmem:[%s179 + $0x780] sm:$0xff]
        %v470 = vld [vmem:[%s179 + $0x788] sm:$0xff]
        %v471 = vld [vmem:[%s179 + $0x790] sm:$0xff]
        %v472 = vld [vmem:[%s179 + $0x798] sm:$0xff]
        %v473 = vld [vmem:[%s179 + $0x7a0] sm:$0xff]
        %v474 = vld [vmem:[%s179 + $0x7a8] sm:$0xff]
        %v475 = vld [vmem:[%s179 + $0x7b0] sm:$0xff]
        %v476 = vld [vmem:[%s179 + $0x7b8] sm:$0xff]
        %v477 = vld [vmem:[%s179 + $0x7c0] sm:$0xff]
        %v478 = vld [vmem:[%s179 + $0x7c8] sm:$0xff]
        %v479 = vld [vmem:[%s179 + $0x7d0] sm:$0xff]
        %v480 = vld [vmem:[%s179 + $0x7d8] sm:$0xff]
        %v481 = vld [vmem:[%s179 + $0x7e0] sm:$0xff]
        %v482 = vld [vmem:[%s179 + $0x7e8] sm:$0xff]
        %v483 = vld [vmem:[%s179 + $0x7f0] sm:$0xff]
        %v484 = vld [vmem:[%s179 + $0x7f8] sm:$0xff]
        %v485 = vld [vmem:[%s179 + $0x800] sm:$0xff]
        %v486 = vld [vmem:[%s179 + $0x808] sm:$0xff]
        %v487 = vld [vmem:[%s179 + $0x810] sm:$0xff]
        %v488 = vld [vmem:[%s179 + $0x818] sm:$0xff]
        %v489 = vld [vmem:[%s179 + $0x820] sm:$0xff]
        %v490 = vld [vmem:[%s179 + $0x828] sm:$0xff]
        %v491 = vld [vmem:[%s179 + $0x830] sm:$0xff]
        %v492 = vld [vmem:[%s179 + $0x838] sm:$0xff]
        %v493 = vld [vmem:[%s179 + $0x840] sm:$0xff]
        %v494 = vld [vmem:[%s179 + $0x848] sm:$0xff]
        %v495 = vld [vmem:[%s179 + $0x850] sm:$0xff]
        %v496 = vld [vmem:[%s179 + $0x858] sm:$0xff]
        %v497 = vld [vmem:[%s179 + $0x860] sm:$0xff]
        %v498 = vld [vmem:[%s179 + $0x868] sm:$0xff]
        %v499 = vld [vmem:[%s179 + $0x870] sm:$0xff]
        %v500 = vld [vmem:[%s179 + $0x878] sm:$0xff]
        %v501 = vld [vmem:[%s179 + $0x880] sm:$0xff]
        %v502 = vld [vmem:[%s179 + $0x888] sm:$0xff]
        %v503 = vld [vmem:[%s179 + $0x890] sm:$0xff]
        %v504 = vld [vmem:[%s179 + $0x898] sm:$0xff]
        %v505 = vld [vmem:[%s179 + $0x8a0] sm:$0xff]
        %v506 = vld [vmem:[%s179 + $0x8a8] sm:$0xff]
        %v507 = vld [vmem:[%s179 + $0x8b0] sm:$0xff]
        %v508 = vld [vmem:[%s179 + $0x8b8] sm:$0xff]
        %v509 = vld [vmem:[%s179 + $0x8c0] sm:$0xff]
        %v510 = vld [vmem:[%s179 + $0x8c8] sm:$0xff]
        %v511 = vld [vmem:[%s179 + $0x8d0] sm:$0xff]
        %v512 = vld [vmem:[%s179 + $0x8d8] sm:$0xff]
        %v513 = vld [vmem:[%s179 + $0x8e0] sm:$0xff]
        %v514 = vld [vmem:[%s179 + $0x8e8] sm:$0xff]
        %v515 = vld [vmem:[%s179 + $0x8f0] sm:$0xff]
        %v516 = vld [vmem:[%s179 + $0x8f8] sm:$0xff]
        %v517 = vld [vmem:[%s179 + $0x900] sm:$0xff]
        %v518 = vld [vmem:[%s179 + $0x908] sm:$0xff]
        %v519 = vld [vmem:[%s179 + $0x910] sm:$0xff]
        %v520 = vld [vmem:[%s179 + $0x918] sm:$0xff]
        %v521 = vld [vmem:[%s179 + $0x920] sm:$0xff]
        %v522 = vld [vmem:[%s179 + $0x928] sm:$0xff]
        %v523 = vld [vmem:[%s179 + $0x930] sm:$0xff]
        %v524 = vld [vmem:[%s179 + $0x938] sm:$0xff]
        %v525 = vld [vmem:[%s179 + $0x940] sm:$0xff]
        %v526 = vld [vmem:[%s179 + $0x948] sm:$0xff]
        %v527 = vld [vmem:[%s179 + $0x950] sm:$0xff]
        %v528 = vld [vmem:[%s179 + $0x958] sm:$0xff]
        %v529 = vld [vmem:[%s179 + $0x960] sm:$0xff]
        %v530 = vld [vmem:[%s179 + $0x968] sm:$0xff]
        %v531 = vld [vmem:[%s179 + $0x970] sm:$0xff]
        %v532 = vld [vmem:[%s179 + $0x978] sm:$0xff]
        %v533 = vld [vmem:[%s179 + $0x980] sm:$0xff]
        %v534 = vld [vmem:[%s179 + $0x988] sm:$0xff]
        %v535 = vld [vmem:[%s179 + $0x990] sm:$0xff]
        %v536 = vld [vmem:[%s179 + $0x998] sm:$0xff]
        %v537 = vld [vmem:[%s179 + $0x9a0] sm:$0xff]
        %v538 = vld [vmem:[%s179 + $0x9a8] sm:$0xff]
        %v539 = vld [vmem:[%s179 + $0x9b0] sm:$0xff]
        %v540 = vld [vmem:[%s179 + $0x9b8] sm:$0xff]
        %v541 = vld [vmem:[%s179 + $0x9c0] sm:$0xff]
        %v542 = vld [vmem:[%s179 + $0x9c8] sm:$0xff]
        %v543 = vld [vmem:[%s179 + $0x9d0] sm:$0xff]
        %v544 = vld [vmem:[%s179 + $0x9d8] sm:$0xff]
        %v545 = vld [vmem:[%s179 + $0x9e0] sm:$0xff]
        %v546 = vld [vmem:[%s179 + $0x9e8] sm:$0xff]
        %v547 = vld [vmem:[%s179 + $0x9f0] sm:$0xff]
        %v548 = vld [vmem:[%s179 + $0x9f8] sm:$0xff]
        %v549 = vld [vmem:[%s179 + $0xa00] sm:$0xff]
        %v550 = vld [vmem:[%s179 + $0xa08] sm:$0xff]
        %v551 = vld [vmem:[%s179 + $0xa10] sm:$0xff]
        %v552 = vld [vmem:[%s179 + $0xa18] sm:$0xff]
        %v553 = vld [vmem:[%s179 + $0xa20] sm:$0xff]
        %v554 = vld [vmem:[%s179 + $0xa28] sm:$0xff]
        %v555 = vld [vmem:[%s179 + $0xa30] sm:$0xff]
        %v556 = vld [vmem:[%s179 + $0xa38] sm:$0xff]
        %v557 = vld [vmem:[%s179 + $0xa40] sm:$0xff]
        %v558 = vld [vmem:[%s179 + $0xa48] sm:$0xff]
        %v559 = vld [vmem:[%s179 + $0xa50] sm:$0xff]
        %v560 = vld [vmem:[%s179 + $0xa58] sm:$0xff]
        %v561 = vld [vmem:[%s179 + $0xa60] sm:$0xff]
        %v562 = vld [vmem:[%s179 + $0xa68] sm:$0xff]
        %v563 = vld [vmem:[%s179 + $0xa70] sm:$0xff]
        %v564 = vld [vmem:[%s179 + $0xa78] sm:$0xff]
        %v565 = vld [vmem:[%s179 + $0xa80] sm:$0xff]
        %v566 = vld [vmem:[%s179 + $0xa88] sm:$0xff]
        %v567 = vld [vmem:[%s179 + $0xa90] sm:$0xff]
        %v568 = vld [vmem:[%s179 + $0xa98] sm:$0xff]
        %v569 = vld [vmem:[%s179 + $0xaa0] sm:$0xff]
        %v570 = vld [vmem:[%s179 + $0xaa8] sm:$0xff]
        %v571 = vld [vmem:[%s179 + $0xab0] sm:$0xff]
        %v572 = vld [vmem:[%s179 + $0xab8] sm:$0xff]
        %v573 = vld [vmem:[%s179 + $0xac0] sm:$0xff]
        %v574 = vld [vmem:[%s179 + $0xac8] sm:$0xff]
        %v575 = vld [vmem:[%s179 + $0xad0] sm:$0xff]
        %v576 = vld [vmem:[%s179 + $0xad8] sm:$0xff]
        %v577 = vld [vmem:[%s179 + $0xae0] sm:$0xff]
        %v578 = vld [vmem:[%s179 + $0xae8] sm:$0xff]
        %v579 = vld [vmem:[%s179 + $0xaf0] sm:$0xff]
        %v580 = vld [vmem:[%s179 + $0xaf8] sm:$0xff]
        %v581 = vld [vmem:[%s179 + $0xb00] sm:$0xff]
        %v582 = vld [vmem:[%s179 + $0xb08] sm:$0xff]
        %v583 = vld [vmem:[%s179 + $0xb10] sm:$0xff]
        %v584 = vld [vmem:[%s179 + $0xb18] sm:$0xff]
        %v585 = vld [vmem:[%s179 + $0xb20] sm:$0xff]
        %v586 = vld [vmem:[%s179 + $0xb28] sm:$0xff]
        %v587 = vld [vmem:[%s179 + $0xb30] sm:$0xff]
        %v588 = vld [vmem:[%s179 + $0xb38] sm:$0xff]
        %v589 = vld [vmem:[%s179 + $0xb40] sm:$0xff]
        %v590 = vld [vmem:[%s179 + $0xb48] sm:$0xff]
        %v591 = vld [vmem:[%s179 + $0xb50] sm:$0xff]
        %v592 = vld [vmem:[%s179 + $0xb58] sm:$0xff]
        %v593 = vld [vmem:[%s179 + $0xb60] sm:$0xff]
        %v594 = vld [vmem:[%s179 + $0xb68] sm:$0xff]
        %v595 = vld [vmem:[%s179 + $0xb70] sm:$0xff]
        %v596 = vld [vmem:[%s179 + $0xb78] sm:$0xff]
        %v597 = vld [vmem:[%s179 + $0xb80] sm:$0xff]
        %v598 = vld [vmem:[%s179 + $0xb88] sm:$0xff]
        %v599 = vld [vmem:[%s179 + $0xb90] sm:$0xff]
        %v600 = vld [vmem:[%s179 + $0xb98] sm:$0xff]
        %v601 = vld [vmem:[%s179 + $0xba0] sm:$0xff]
        %v602 = vld [vmem:[%s179 + $0xba8] sm:$0xff]
        %v603 = vld [vmem:[%s179 + $0xbb0] sm:$0xff]
        %v604 = vld [vmem:[%s179 + $0xbb8] sm:$0xff]
        %v605 = vld [vmem:[%s179 + $0xbc0] sm:$0xff]
        %v606 = vld [vmem:[%s179 + $0xbc8] sm:$0xff]
        %v607 = vld [vmem:[%s179 + $0xbd0] sm:$0xff]
        %v608 = vld [vmem:[%s179 + $0xbd8] sm:$0xff]
        %v609 = vld [vmem:[%s179 + $0xbe0] sm:$0xff]
        %v610 = vld [vmem:[%s179 + $0xbe8] sm:$0xff]
        %v611 = vld [vmem:[%s179 + $0xbf0] sm:$0xff]
        %v612 = vld [vmem:[%s179 + $0xbf8] sm:$0xff]
        %v613 = vld [vmem:[%s179 + $0xc00] sm:$0xff]
        %v614 = vld [vmem:[%s179 + $0xc08] sm:$0xff]
        %v615 = vld [vmem:[%s188] sm:$0xff]
        %v616 = vld [vmem:[%s188 + $0x8] sm:$0xff]
        %v617 = vld [vmem:[%s188 + $0x10] sm:$0xff]
        %v618 = vld [vmem:[%s188 + $0x18] sm:$0xff]
        %v619 = vld [vmem:[%s188 + $0x20] sm:$0xff]
        %v620 = vld [vmem:[%s188 + $0x28] sm:$0xff]
        %v621 = vld [vmem:[%s188 + $0x30] sm:$0xff]
        %v622 = vld [vmem:[%s188 + $0x38] sm:$0xff]
        %v623 = vld [vmem:[%s188 + $0x40] sm:$0xff]
        %v624 = vld [vmem:[%s188 + $0x48] sm:$0xff]
        %v625 = vld [vmem:[%s188 + $0x50] sm:$0xff]
        %v626 = vld [vmem:[%s188 + $0x58] sm:$0xff]
        %v627 = vld [vmem:[%s188 + $0x60] sm:$0xff]
        %v628 = vld [vmem:[%s188 + $0x68] sm:$0xff]
        %v629 = vld [vmem:[%s188 + $0x70] sm:$0xff]
        %v630 = vld [vmem:[%s188 + $0x78] sm:$0xff]
        %v631 = vld [vmem:[%s188 + $0x80] sm:$0xff]
        %v632 = vld [vmem:[%s188 + $0x88] sm:$0xff]
        %v633 = vld [vmem:[%s188 + $0x90] sm:$0xff]
        %v634 = vld [vmem:[%s188 + $0x98] sm:$0xff]
        %v635 = vld [vmem:[%s188 + $0xa0] sm:$0xff]
        %v636 = vld [vmem:[%s188 + $0xa8] sm:$0xff]
        %v637 = vld [vmem:[%s188 + $0xb0] sm:$0xff]
        %v638 = vld [vmem:[%s188 + $0xb8] sm:$0xff]
        %v639 = vld [vmem:[%s188 + $0xc0] sm:$0xff]
        %v640 = vld [vmem:[%s188 + $0xc8] sm:$0xff]
        %v641 = vld [vmem:[%s188 + $0xd0] sm:$0xff]
        %v642 = vld [vmem:[%s188 + $0xd8] sm:$0xff]
        %v643 = vld [vmem:[%s188 + $0xe0] sm:$0xff]
        %v644 = vld [vmem:[%s188 + $0xe8] sm:$0xff]
        %v645 = vld [vmem:[%s188 + $0xf0] sm:$0xff]
        %v646 = vld [vmem:[%s188 + $0xf8] sm:$0xff]
        %v647 = vld [vmem:[%s188 + $0x100] sm:$0xff]
        %v648 = vld [vmem:[%s188 + $0x108] sm:$0xff]
        %v649 = vld [vmem:[%s188 + $0x110] sm:$0xff]
        %v650 = vld [vmem:[%s188 + $0x118] sm:$0xff]
        %v651 = vld [vmem:[%s188 + $0x120] sm:$0xff]
        %v652 = vld [vmem:[%s188 + $0x128] sm:$0xff]
        %v653 = vld [vmem:[%s188 + $0x130] sm:$0xff]
        %v654 = vld [vmem:[%s188 + $0x138] sm:$0xff]
        %v655 = vld [vmem:[%s188 + $0x140] sm:$0xff]
        %v656 = vld [vmem:[%s188 + $0x148] sm:$0xff]
        %v657 = vld [vmem:[%s188 + $0x150] sm:$0xff]
        %v658 = vld [vmem:[%s188 + $0x158] sm:$0xff]
        %v659 = vld [vmem:[%s188 + $0x160] sm:$0xff]
        %v660 = vld [vmem:[%s188 + $0x168] sm:$0xff]
        %v661 = vld [vmem:[%s188 + $0x170] sm:$0xff]
        %v662 = vld [vmem:[%s188 + $0x178] sm:$0xff]
        %v663 = vld [vmem:[%s188 + $0x180] sm:$0xff]
        %v664 = vld [vmem:[%s188 + $0x188] sm:$0xff]
        %v665 = vld [vmem:[%s188 + $0x190] sm:$0xff]
        %v666 = vld [vmem:[%s188 + $0x198] sm:$0xff]
        %v667 = vld [vmem:[%s188 + $0x1a0] sm:$0xff]
        %v668 = vld [vmem:[%s188 + $0x1a8] sm:$0xff]
        %v669 = vld [vmem:[%s188 + $0x1b0] sm:$0xff]
        %v670 = vld [vmem:[%s188 + $0x1b8] sm:$0xff]
        %v671 = vld [vmem:[%s188 + $0x1c0] sm:$0xff]
        %v672 = vld [vmem:[%s188 + $0x1c8] sm:$0xff]
        %v673 = vld [vmem:[%s188 + $0x1d0] sm:$0xff]
        %v674 = vld [vmem:[%s188 + $0x1d8] sm:$0xff]
        %v675 = vld [vmem:[%s188 + $0x1e0] sm:$0xff]
        %v676 = vld [vmem:[%s188 + $0x1e8] sm:$0xff]
        %v677 = vld [vmem:[%s188 + $0x1f0] sm:$0xff]
        %v678 = vld [vmem:[%s188 + $0x1f8] sm:$0xff]
        %v679 = vld [vmem:[%s188 + $0x200] sm:$0xff]
        %v680 = vld [vmem:[%s188 + $0x208] sm:$0xff]
        %v681 = vld [vmem:[%s188 + $0x210] sm:$0xff]
        %v682 = vld [vmem:[%s188 + $0x218] sm:$0xff]
        %v683 = vld [vmem:[%s188 + $0x220] sm:$0xff]
        %v684 = vld [vmem:[%s188 + $0x228] sm:$0xff]
        %v685 = vld [vmem:[%s188 + $0x230] sm:$0xff]
        %v686 = vld [vmem:[%s188 + $0x238] sm:$0xff]
        %v687 = vld [vmem:[%s188 + $0x240] sm:$0xff]
        %v688 = vld [vmem:[%s188 + $0x248] sm:$0xff]
        %v689 = vld [vmem:[%s188 + $0x250] sm:$0xff]
        %v690 = vld [vmem:[%s188 + $0x258] sm:$0xff]
        %v691 = vld [vmem:[%s188 + $0x260] sm:$0xff]
        %v692 = vld [vmem:[%s188 + $0x268] sm:$0xff]
        %v693 = vld [vmem:[%s188 + $0x270] sm:$0xff]
        %v694 = vld [vmem:[%s188 + $0x278] sm:$0xff]
        %v695 = vld [vmem:[%s188 + $0x280] sm:$0xff]
        %v696 = vld [vmem:[%s188 + $0x288] sm:$0xff]
        %v697 = vld [vmem:[%s188 + $0x290] sm:$0xff]
        %v698 = vld [vmem:[%s188 + $0x298] sm:$0xff]
        %v699 = vld [vmem:[%s188 + $0x2a0] sm:$0xff]
        %v700 = vld [vmem:[%s188 + $0x2a8] sm:$0xff]
        %v701 = vld [vmem:[%s188 + $0x2b0] sm:$0xff]
        %v702 = vld [vmem:[%s188 + $0x2b8] sm:$0xff]
        %v703 = vld [vmem:[%s188 + $0x2c0] sm:$0xff]
        %v704 = vld [vmem:[%s188 + $0x2c8] sm:$0xff]
        %v705 = vld [vmem:[%s188 + $0x2d0] sm:$0xff]
        %v706 = vld [vmem:[%s188 + $0x2d8] sm:$0xff]
        %v707 = vld [vmem:[%s188 + $0x2e0] sm:$0xff]
        %v708 = vld [vmem:[%s188 + $0x2e8] sm:$0xff]
        %v709 = vld [vmem:[%s188 + $0x2f0] sm:$0xff]
        %v710 = vld [vmem:[%s188 + $0x2f8] sm:$0xff]
        %v711 = vld [vmem:[%s188 + $0x300] sm:$0xff]
        %v712 = vld [vmem:[%s188 + $0x308] sm:$0xff]
        %v713 = vld [vmem:[%s188 + $0x310] sm:$0xff]
        %v714 = vld [vmem:[%s188 + $0x318] sm:$0xff]
        %v715 = vld [vmem:[%s188 + $0x320] sm:$0xff]
        %v716 = vld [vmem:[%s188 + $0x328] sm:$0xff]
        %v717 = vld [vmem:[%s188 + $0x330] sm:$0xff]
        %v718 = vld [vmem:[%s188 + $0x338] sm:$0xff]
        %v719 = vld [vmem:[%s188 + $0x340] sm:$0xff]
        %v720 = vld [vmem:[%s188 + $0x348] sm:$0xff]
        %v721 = vld [vmem:[%s188 + $0x350] sm:$0xff]
        %v722 = vld [vmem:[%s188 + $0x358] sm:$0xff]
        %v723 = vld [vmem:[%s188 + $0x360] sm:$0xff]
        %v724 = vld [vmem:[%s188 + $0x368] sm:$0xff]
        %v725 = vld [vmem:[%s188 + $0x370] sm:$0xff]
        %v726 = vld [vmem:[%s188 + $0x378] sm:$0xff]
        %v727 = vld [vmem:[%s188 + $0x380] sm:$0xff]
        %v728 = vld [vmem:[%s188 + $0x388] sm:$0xff]
        %v729 = vld [vmem:[%s188 + $0x390] sm:$0xff]
        %v730 = vld [vmem:[%s188 + $0x398] sm:$0xff]
        %v731 = vld [vmem:[%s188 + $0x3a0] sm:$0xff]
        %v732 = vld [vmem:[%s188 + $0x3a8] sm:$0xff]
        %v733 = vld [vmem:[%s188 + $0x3b0] sm:$0xff]
        %v734 = vld [vmem:[%s188 + $0x3b8] sm:$0xff]
        %v735 = vld [vmem:[%s188 + $0x3c0] sm:$0xff]
        %v736 = vld [vmem:[%s188 + $0x3c8] sm:$0xff]
        %v737 = vld [vmem:[%s188 + $0x3d0] sm:$0xff]
        %v738 = vld [vmem:[%s188 + $0x3d8] sm:$0xff]
        %v739 = vld [vmem:[%s188 + $0x3e0] sm:$0xff]
        %v740 = vld [vmem:[%s188 + $0x3e8] sm:$0xff]
        %v741 = vld [vmem:[%s188 + $0x3f0] sm:$0xff]
        %v742 = vld [vmem:[%s188 + $0x3f8] sm:$0xff]
        %v743 = vld [vmem:[%s188 + $0x400] sm:$0xff]
        %v744 = vld [vmem:[%s188 + $0x408] sm:$0xff]
        %v745 = vld [vmem:[%s188 + $0x410] sm:$0xff]
        %v746 = vld [vmem:[%s188 + $0x418] sm:$0xff]
        %v747 = vld [vmem:[%s188 + $0x420] sm:$0xff]
        %v748 = vld [vmem:[%s188 + $0x428] sm:$0xff]
        %v749 = vld [vmem:[%s188 + $0x430] sm:$0xff]
        %v750 = vld [vmem:[%s188 + $0x438] sm:$0xff]
        %v751 = vld [vmem:[%s188 + $0x440] sm:$0xff]
        %v752 = vld [vmem:[%s188 + $0x448] sm:$0xff]
        %v753 = vld [vmem:[%s188 + $0x450] sm:$0xff]
        %v754 = vld [vmem:[%s188 + $0x458] sm:$0xff]
        %v755 = vld [vmem:[%s188 + $0x460] sm:$0xff]
        %v756 = vld [vmem:[%s188 + $0x468] sm:$0xff]
        %v757 = vld [vmem:[%s188 + $0x470] sm:$0xff]
        %v758 = vld [vmem:[%s188 + $0x478] sm:$0xff]
        %v759 = vld [vmem:[%s188 + $0x480] sm:$0xff]
        %v760 = vld [vmem:[%s188 + $0x488] sm:$0xff]
        %v761 = vld [vmem:[%s188 + $0x490] sm:$0xff]
        %v762 = vld [vmem:[%s188 + $0x498] sm:$0xff]
        %v763 = vld [vmem:[%s188 + $0x4a0] sm:$0xff]
        %v764 = vld [vmem:[%s188 + $0x4a8] sm:$0xff]
        %v765 = vld [vmem:[%s188 + $0x4b0] sm:$0xff]
        %v766 = vld [vmem:[%s188 + $0x4b8] sm:$0xff]
        %v767 = vld [vmem:[%s188 + $0x4c0] sm:$0xff]
        %v768 = vld [vmem:[%s188 + $0x4c8] sm:$0xff]
        %v769 = vld [vmem:[%s188 + $0x4d0] sm:$0xff]
        %v770 = vld [vmem:[%s188 + $0x4d8] sm:$0xff]
        %v771 = vld [vmem:[%s188 + $0x4e0] sm:$0xff]
        %v772 = vld [vmem:[%s188 + $0x4e8] sm:$0xff]
        %v773 = vld [vmem:[%s188 + $0x4f0] sm:$0xff]
        %v774 = vld [vmem:[%s188 + $0x4f8] sm:$0xff]
        %v775 = vld [vmem:[%s188 + $0x500] sm:$0xff]
        %v776 = vld [vmem:[%s188 + $0x508] sm:$0xff]
        %v777 = vld [vmem:[%s188 + $0x510] sm:$0xff]
        %v778 = vld [vmem:[%s188 + $0x518] sm:$0xff]
        %v779 = vld [vmem:[%s188 + $0x520] sm:$0xff]
        %v780 = vld [vmem:[%s188 + $0x528] sm:$0xff]
        %v781 = vld [vmem:[%s188 + $0x530] sm:$0xff]
        %v782 = vld [vmem:[%s188 + $0x538] sm:$0xff]
        %v783 = vld [vmem:[%s188 + $0x540] sm:$0xff]
        %v784 = vld [vmem:[%s188 + $0x548] sm:$0xff]
        %v785 = vld [vmem:[%s188 + $0x550] sm:$0xff]
        %v786 = vld [vmem:[%s188 + $0x558] sm:$0xff]
        %v787 = vld [vmem:[%s188 + $0x560] sm:$0xff]
        %v788 = vld [vmem:[%s188 + $0x568] sm:$0xff]
        %v789 = vld [vmem:[%s188 + $0x570] sm:$0xff]
        %v790 = vld [vmem:[%s188 + $0x578] sm:$0xff]
        %v791 = vld [vmem:[%s188 + $0x580] sm:$0xff]
        %v792 = vld [vmem:[%s188 + $0x588] sm:$0xff]
        %v793 = vld [vmem:[%s188 + $0x590] sm:$0xff]
        %v794 = vld [vmem:[%s188 + $0x598] sm:$0xff]
        %v795 = vld [vmem:[%s188 + $0x5a0] sm:$0xff]
        %v796 = vld [vmem:[%s188 + $0x5a8] sm:$0xff]
        %v797 = vld [vmem:[%s188 + $0x5b0] sm:$0xff]
        %v798 = vld [vmem:[%s188 + $0x5b8] sm:$0xff]
        %v799 = vld [vmem:[%s188 + $0x5c0] sm:$0xff]
        %v800 = vld [vmem:[%s188 + $0x5c8] sm:$0xff]
        %v801 = vld [vmem:[%s188 + $0x5d0] sm:$0xff]
        %v802 = vld [vmem:[%s188 + $0x5d8] sm:$0xff]
        %v803 = vld [vmem:[%s188 + $0x5e0] sm:$0xff]
        %v804 = vld [vmem:[%s188 + $0x5e8] sm:$0xff]
        %v805 = vld [vmem:[%s188 + $0x5f0] sm:$0xff]
        %v806 = vld [vmem:[%s188 + $0x5f8] sm:$0xff]
        %v807 = vld [vmem:[%s188 + $0x600] sm:$0xff]
        %v808 = vld [vmem:[%s188 + $0x608] sm:$0xff]
        %v809 = vld [vmem:[%s188 + $0x610] sm:$0xff]
        %v810 = vld [vmem:[%s188 + $0x618] sm:$0xff]
        %v811 = vld [vmem:[%s188 + $0x620] sm:$0xff]
        %v812 = vld [vmem:[%s188 + $0x628] sm:$0xff]
        %v813 = vld [vmem:[%s188 + $0x630] sm:$0xff]
        %v814 = vld [vmem:[%s188 + $0x638] sm:$0xff]
        %v815 = vld [vmem:[%s188 + $0x640] sm:$0xff]
        %v816 = vld [vmem:[%s188 + $0x648] sm:$0xff]
        %v817 = vld [vmem:[%s188 + $0x650] sm:$0xff]
        %v818 = vld [vmem:[%s188 + $0x658] sm:$0xff]
        %v819 = vld [vmem:[%s188 + $0x660] sm:$0xff]
        %v820 = vld [vmem:[%s188 + $0x668] sm:$0xff]
        %v821 = vld [vmem:[%s188 + $0x670] sm:$0xff]
        %v822 = vld [vmem:[%s188 + $0x678] sm:$0xff]
        %v823 = vld [vmem:[%s188 + $0x680] sm:$0xff]
        %v824 = vld [vmem:[%s188 + $0x688] sm:$0xff]
        %v825 = vld [vmem:[%s188 + $0x690] sm:$0xff]
        %v826 = vld [vmem:[%s188 + $0x698] sm:$0xff]
        %v827 = vld [vmem:[%s188 + $0x6a0] sm:$0xff]
        %v828 = vld [vmem:[%s188 + $0x6a8] sm:$0xff]
        %v829 = vld [vmem:[%s188 + $0x6b0] sm:$0xff]
        %v830 = vld [vmem:[%s188 + $0x6b8] sm:$0xff]
        %v831 = vld [vmem:[%s188 + $0x6c0] sm:$0xff]
        %v832 = vld [vmem:[%s188 + $0x6c8] sm:$0xff]
        %v833 = vld [vmem:[%s188 + $0x6d0] sm:$0xff]
        %v834 = vld [vmem:[%s188 + $0x6d8] sm:$0xff]
        %v835 = vld [vmem:[%s188 + $0x6e0] sm:$0xff]
        %v836 = vld [vmem:[%s188 + $0x6e8] sm:$0xff]
        %v837 = vld [vmem:[%s188 + $0x6f0] sm:$0xff]
        %v838 = vld [vmem:[%s188 + $0x6f8] sm:$0xff]
        %v839 = vld [vmem:[%s188 + $0x700] sm:$0xff]
        %v840 = vld [vmem:[%s188 + $0x708] sm:$0xff]
        %v841 = vld [vmem:[%s188 + $0x710] sm:$0xff]
        %v842 = vld [vmem:[%s188 + $0x718] sm:$0xff]
        %v843 = vld [vmem:[%s188 + $0x720] sm:$0xff]
        %v844 = vld [vmem:[%s188 + $0x728] sm:$0xff]
        %v845 = vld [vmem:[%s188 + $0x730] sm:$0xff]
        %v846 = vld [vmem:[%s188 + $0x738] sm:$0xff]
        %v847 = vld [vmem:[%s188 + $0x740] sm:$0xff]
        %v848 = vld [vmem:[%s188 + $0x748] sm:$0xff]
        %v849 = vld [vmem:[%s188 + $0x750] sm:$0xff]
        %v850 = vld [vmem:[%s188 + $0x758] sm:$0xff]
        %v851 = vld [vmem:[%s188 + $0x760] sm:$0xff]
        %v852 = vld [vmem:[%s188 + $0x768] sm:$0xff]
        %v853 = vld [vmem:[%s188 + $0x770] sm:$0xff]
        %v854 = vld [vmem:[%s188 + $0x778] sm:$0xff]
        %v855 = vld [vmem:[%s188 + $0x780] sm:$0xff]
        %v856 = vld [vmem:[%s188 + $0x788] sm:$0xff]
        %v857 = vld [vmem:[%s188 + $0x790] sm:$0xff]
        %v858 = vld [vmem:[%s188 + $0x798] sm:$0xff]
        %v859 = vld [vmem:[%s188 + $0x7a0] sm:$0xff]
        %v860 = vld [vmem:[%s188 + $0x7a8] sm:$0xff]
        %v861 = vld [vmem:[%s188 + $0x7b0] sm:$0xff]
        %v862 = vld [vmem:[%s188 + $0x7b8] sm:$0xff]
        %v863 = vld [vmem:[%s188 + $0x7c0] sm:$0xff]
        %v864 = vld [vmem:[%s188 + $0x7c8] sm:$0xff]
        %v865 = vld [vmem:[%s188 + $0x7d0] sm:$0xff]
        %v866 = vld [vmem:[%s188 + $0x7d8] sm:$0xff]
        %v867 = vld [vmem:[%s188 + $0x7e0] sm:$0xff]
        %v868 = vld [vmem:[%s188 + $0x7e8] sm:$0xff]
        %v869 = vld [vmem:[%s188 + $0x7f0] sm:$0xff]
        %v870 = vld [vmem:[%s188 + $0x7f8] sm:$0xff]
        %v871 = vld [vmem:[%s188 + $0x800] sm:$0xff]
        %v872 = vld [vmem:[%s188 + $0x808] sm:$0xff]
        %v873 = vld [vmem:[%s188 + $0x810] sm:$0xff]
        %v874 = vld [vmem:[%s188 + $0x818] sm:$0xff]
        %v875 = vld [vmem:[%s188 + $0x820] sm:$0xff]
        %v876 = vld [vmem:[%s188 + $0x828] sm:$0xff]
        %v877 = vld [vmem:[%s188 + $0x830] sm:$0xff]
        %v878 = vld [vmem:[%s188 + $0x838] sm:$0xff]
        %v879 = vld [vmem:[%s188 + $0x840] sm:$0xff]
        %v880 = vld [vmem:[%s188 + $0x848] sm:$0xff]
        %v881 = vld [vmem:[%s188 + $0x850] sm:$0xff]
        %v882 = vld [vmem:[%s188 + $0x858] sm:$0xff]
        %v883 = vld [vmem:[%s188 + $0x860] sm:$0xff]
        %v884 = vld [vmem:[%s188 + $0x868] sm:$0xff]
        %v885 = vld [vmem:[%s188 + $0x870] sm:$0xff]
        %v886 = vld [vmem:[%s188 + $0x878] sm:$0xff]
        %v887 = vld [vmem:[%s188 + $0x880] sm:$0xff]
        %v888 = vld [vmem:[%s188 + $0x888] sm:$0xff]
        %v889 = vld [vmem:[%s188 + $0x890] sm:$0xff]
        %v890 = vld [vmem:[%s188 + $0x898] sm:$0xff]
        %v891 = vld [vmem:[%s188 + $0x8a0] sm:$0xff]
        %v892 = vld [vmem:[%s188 + $0x8a8] sm:$0xff]
        %v893 = vld [vmem:[%s188 + $0x8b0] sm:$0xff]
        %v894 = vld [vmem:[%s188 + $0x8b8] sm:$0xff]
        %v895 = vld [vmem:[%s188 + $0x8c0] sm:$0xff]
        %v896 = vld [vmem:[%s188 + $0x8c8] sm:$0xff]
        %v897 = vld [vmem:[%s188 + $0x8d0] sm:$0xff]
        %v898 = vld [vmem:[%s188 + $0x8d8] sm:$0xff]
        %v899 = vld [vmem:[%s188 + $0x8e0] sm:$0xff]
        %v900 = vld [vmem:[%s188 + $0x8e8] sm:$0xff]
        %v901 = vld [vmem:[%s188 + $0x8f0] sm:$0xff]
        %v902 = vld [vmem:[%s188 + $0x8f8] sm:$0xff]
        %v903 = vld [vmem:[%s188 + $0x900] sm:$0xff]
        %v904 = vld [vmem:[%s188 + $0x908] sm:$0xff]
        %v905 = vld [vmem:[%s188 + $0x910] sm:$0xff]
        %v906 = vld [vmem:[%s188 + $0x918] sm:$0xff]
        %v907 = vld [vmem:[%s188 + $0x920] sm:$0xff]
        %v908 = vld [vmem:[%s188 + $0x928] sm:$0xff]
        %v909 = vld [vmem:[%s188 + $0x930] sm:$0xff]
        %v910 = vld [vmem:[%s188 + $0x938] sm:$0xff]
        %v911 = vld [vmem:[%s188 + $0x940] sm:$0xff]
        %v912 = vld [vmem:[%s188 + $0x948] sm:$0xff]
        %v913 = vld [vmem:[%s188 + $0x950] sm:$0xff]
        %v914 = vld [vmem:[%s188 + $0x958] sm:$0xff]
        %v915 = vld [vmem:[%s188 + $0x960] sm:$0xff]
        %v916 = vld [vmem:[%s188 + $0x968] sm:$0xff]
        %v917 = vld [vmem:[%s188 + $0x970] sm:$0xff]
        %v918 = vld [vmem:[%s188 + $0x978] sm:$0xff]
        %v919 = vld [vmem:[%s188 + $0x980] sm:$0xff]
        %v920 = vld [vmem:[%s188 + $0x988] sm:$0xff]
        %v921 = vld [vmem:[%s188 + $0x990] sm:$0xff]
        %v922 = vld [vmem:[%s188 + $0x998] sm:$0xff]
        %v923 = vld [vmem:[%s188 + $0x9a0] sm:$0xff]
        %v924 = vld [vmem:[%s188 + $0x9a8] sm:$0xff]
        %v925 = vld [vmem:[%s188 + $0x9b0] sm:$0xff]
        %v926 = vld [vmem:[%s188 + $0x9b8] sm:$0xff]
        %v927 = vld [vmem:[%s188 + $0x9c0] sm:$0xff]
        %v928 = vld [vmem:[%s188 + $0x9c8] sm:$0xff]
        %v929 = vld [vmem:[%s188 + $0x9d0] sm:$0xff]
        %v930 = vld [vmem:[%s188 + $0x9d8] sm:$0xff]
        %v931 = vld [vmem:[%s188 + $0x9e0] sm:$0xff]
        %v932 = vld [vmem:[%s188 + $0x9e8] sm:$0xff]
        %v933 = vld [vmem:[%s188 + $0x9f0] sm:$0xff]
        %v934 = vld [vmem:[%s188 + $0x9f8] sm:$0xff]
        %v935 = vld [vmem:[%s188 + $0xa00] sm:$0xff]
        %v936 = vld [vmem:[%s188 + $0xa08] sm:$0xff]
        %v937 = vld [vmem:[%s188 + $0xa10] sm:$0xff]
        %v938 = vld [vmem:[%s188 + $0xa18] sm:$0xff]
        %v939 = vld [vmem:[%s188 + $0xa20] sm:$0xff]
        %v940 = vld [vmem:[%s188 + $0xa28] sm:$0xff]
        %v941 = vld [vmem:[%s188 + $0xa30] sm:$0xff]
        %v942 = vld [vmem:[%s188 + $0xa38] sm:$0xff]
        %v943 = vld [vmem:[%s188 + $0xa40] sm:$0xff]
        %v944 = vld [vmem:[%s188 + $0xa48] sm:$0xff]
        %v945 = vld [vmem:[%s188 + $0xa50] sm:$0xff]
        %v946 = vld [vmem:[%s188 + $0xa58] sm:$0xff]
        %v947 = vld [vmem:[%s188 + $0xa60] sm:$0xff]
        %v948 = vld [vmem:[%s188 + $0xa68] sm:$0xff]
        %v949 = vld [vmem:[%s188 + $0xa70] sm:$0xff]
        %v950 = vld [vmem:[%s188 + $0xa78] sm:$0xff]
        %v951 = vld [vmem:[%s188 + $0xa80] sm:$0xff]
        %v952 = vld [vmem:[%s188 + $0xa88] sm:$0xff]
        %v953 = vld [vmem:[%s188 + $0xa90] sm:$0xff]
        %v954 = vld [vmem:[%s188 + $0xa98] sm:$0xff]
        %v955 = vld [vmem:[%s188 + $0xaa0] sm:$0xff]
        %v956 = vld [vmem:[%s188 + $0xaa8] sm:$0xff]
        %v957 = vld [vmem:[%s188 + $0xab0] sm:$0xff]
        %v958 = vld [vmem:[%s188 + $0xab8] sm:$0xff]
        %v959 = vld [vmem:[%s188 + $0xac0] sm:$0xff]
        %v960 = vld [vmem:[%s188 + $0xac8] sm:$0xff]
        %v961 = vld [vmem:[%s188 + $0xad0] sm:$0xff]
        %v962 = vld [vmem:[%s188 + $0xad8] sm:$0xff]
        %v963 = vld [vmem:[%s188 + $0xae0] sm:$0xff]
        %v964 = vld [vmem:[%s188 + $0xae8] sm:$0xff]
        %v965 = vld [vmem:[%s188 + $0xaf0] sm:$0xff]
        %v966 = vld [vmem:[%s188 + $0xaf8] sm:$0xff]
        %v967 = vld [vmem:[%s188 + $0xb00] sm:$0xff]
        %v968 = vld [vmem:[%s188 + $0xb08] sm:$0xff]
        %v969 = vld [vmem:[%s188 + $0xb10] sm:$0xff]
        %v970 = vld [vmem:[%s188 + $0xb18] sm:$0xff]
        %v971 = vld [vmem:[%s188 + $0xb20] sm:$0xff]
        %v972 = vld [vmem:[%s188 + $0xb28] sm:$0xff]
        %v973 = vld [vmem:[%s188 + $0xb30] sm:$0xff]
        %v974 = vld [vmem:[%s188 + $0xb38] sm:$0xff]
        %v975 = vld [vmem:[%s188 + $0xb40] sm:$0xff]
        %v976 = vld [vmem:[%s188 + $0xb48] sm:$0xff]
        %v977 = vld [vmem:[%s188 + $0xb50] sm:$0xff]
        %v978 = vld [vmem:[%s188 + $0xb58] sm:$0xff]
        %v979 = vld [vmem:[%s188 + $0xb60] sm:$0xff]
        %v980 = vld [vmem:[%s188 + $0xb68] sm:$0xff]
        %v981 = vld [vmem:[%s188 + $0xb70] sm:$0xff]
        %v982 = vld [vmem:[%s188 + $0xb78] sm:$0xff]
        %v983 = vld [vmem:[%s188 + $0xb80] sm:$0xff]
        %v984 = vld [vmem:[%s188 + $0xb88] sm:$0xff]
        %v985 = vld [vmem:[%s188 + $0xb90] sm:$0xff]
        %v986 = vld [vmem:[%s188 + $0xb98] sm:$0xff]
        %v987 = vld [vmem:[%s188 + $0xba0] sm:$0xff]
        %v988 = vld [vmem:[%s188 + $0xba8] sm:$0xff]
        %v989 = vld [vmem:[%s188 + $0xbb0] sm:$0xff]
        %v990 = vld [vmem:[%s188 + $0xbb8] sm:$0xff]
        %v991 = vld [vmem:[%s188 + $0xbc0] sm:$0xff]
        %v992 = vld [vmem:[%s188 + $0xbc8] sm:$0xff]
        %v993 = vld [vmem:[%s188 + $0xbd0] sm:$0xff]
        %v994 = vld [vmem:[%s188 + $0xbd8] sm:$0xff]
        %v995 = vld [vmem:[%s188 + $0xbe0] sm:$0xff]
        %v996 = vld [vmem:[%s188 + $0xbe8] sm:$0xff]
        %v997 = vld [vmem:[%s188 + $0xbf0] sm:$0xff]
        %v998 = vld [vmem:[%s188 + $0xbf8] sm:$0xff]
        %v999 = vld [vmem:[%s188 + $0xc00] sm:$0xff]
        %v1000 = vld [vmem:[%s188 + $0xc08] sm:$0xff]
        %v1001 = vadd.f32 %v229, %v615
        %v1002 = vadd.f32 %v230, %v616
        %v1003 = vadd.f32 %v231, %v617
        %v1004 = vadd.f32 %v232, %v618
        %v1005 = vadd.f32 %v233, %v619
        %v1006 = vadd.f32 %v234, %v620
        %v1007 = vadd.f32 %v235, %v621
        %v1008 = vadd.f32 %v236, %v622
        %v1009 = vadd.f32 %v237, %v623
        %v1010 = vadd.f32 %v238, %v624
        %v1011 = vadd.f32 %v239, %v625
        %v1012 = vadd.f32 %v240, %v626
        %v1013 = vadd.f32 %v241, %v627
        %v1014 = vadd.f32 %v242, %v628
        %v1015 = vadd.f32 %v243, %v629
        %v1016 = vadd.f32 %v244, %v630
        %v1017 = vadd.f32 %v245, %v631
        %v1018 = vadd.f32 %v246, %v632
        %v1019 = vadd.f32 %v247, %v633
        %v1020 = vadd.f32 %v248, %v634
        %v1021 = vadd.f32 %v249, %v635
        %v1022 = vadd.f32 %v250, %v636
        %v1023 = vadd.f32 %v251, %v637
        %v1024 = vadd.f32 %v252, %v638
        %v1025 = vadd.f32 %v253, %v639
        %v1026 = vadd.f32 %v254, %v640
        %v1027 = vadd.f32 %v255, %v641
        %v1028 = vadd.f32 %v256, %v642
        %v1029 = vadd.f32 %v257, %v643
        %v1030 = vadd.f32 %v258, %v644
        %v1031 = vadd.f32 %v259, %v645
        %v1032 = vadd.f32 %v260, %v646
        %v1033 = vadd.f32 %v261, %v647
        %v1034 = vadd.f32 %v262, %v648
        %v1035 = vadd.f32 %v263, %v649
        %v1036 = vadd.f32 %v264, %v650
        %v1037 = vadd.f32 %v265, %v651
        %v1038 = vadd.f32 %v266, %v652
        %v1039 = vadd.f32 %v267, %v653
        %v1040 = vadd.f32 %v268, %v654
        %v1041 = vadd.f32 %v269, %v655
        %v1042 = vadd.f32 %v270, %v656
        %v1043 = vadd.f32 %v271, %v657
        %v1044 = vadd.f32 %v272, %v658
        %v1045 = vadd.f32 %v273, %v659
        %v1046 = vadd.f32 %v274, %v660
        %v1047 = vadd.f32 %v275, %v661
        %v1048 = vadd.f32 %v276, %v662
        %v1049 = vadd.f32 %v277, %v663
        %v1050 = vadd.f32 %v278, %v664
        %v1051 = vadd.f32 %v279, %v665
        %v1052 = vadd.f32 %v280, %v666
        %v1053 = vadd.f32 %v281, %v667
        %v1054 = vadd.f32 %v282, %v668
        %v1055 = vadd.f32 %v283, %v669
        %v1056 = vadd.f32 %v284, %v670
        %v1057 = vadd.f32 %v285, %v671
        %v1058 = vadd.f32 %v286, %v672
        %v1059 = vadd.f32 %v287, %v673
        %v1060 = vadd.f32 %v288, %v674
        %v1061 = vadd.f32 %v289, %v675
        %v1062 = vadd.f32 %v290, %v676
        %v1063 = vadd.f32 %v291, %v677
        %v1064 = vadd.f32 %v292, %v678
        %v1065 = vadd.f32 %v293, %v679
        %v1066 = vadd.f32 %v294, %v680
        %v1067 = vadd.f32 %v295, %v681
        %v1068 = vadd.f32 %v296, %v682
        %v1069 = vadd.f32 %v297, %v683
        %v1070 = vadd.f32 %v298, %v684
        %v1071 = vadd.f32 %v299, %v685
        %v1072 = vadd.f32 %v300, %v686
        %v1073 = vadd.f32 %v301, %v687
        %v1074 = vadd.f32 %v302, %v688
        %v1075 = vadd.f32 %v303, %v689
        %v1076 = vadd.f32 %v304, %v690
        %v1077 = vadd.f32 %v305, %v691
        %v1078 = vadd.f32 %v306, %v692
        %v1079 = vadd.f32 %v307, %v693
        %v1080 = vadd.f32 %v308, %v694
        %v1081 = vadd.f32 %v309, %v695
        %v1082 = vadd.f32 %v310, %v696
        %v1083 = vadd.f32 %v311, %v697
        %v1084 = vadd.f32 %v312, %v698
        %v1085 = vadd.f32 %v313, %v699
        %v1086 = vadd.f32 %v314, %v700
        %v1087 = vadd.f32 %v315, %v701
        %v1088 = vadd.f32 %v316, %v702
        %v1089 = vadd.f32 %v317, %v703
        %v1090 = vadd.f32 %v318, %v704
        %v1091 = vadd.f32 %v319, %v705
        %v1092 = vadd.f32 %v320, %v706
        %v1093 = vadd.f32 %v321, %v707
        %v1094 = vadd.f32 %v322, %v708
        %v1095 = vadd.f32 %v323, %v709
        %v1096 = vadd.f32 %v324, %v710
        %v1097 = vadd.f32 %v325, %v711
        %v1098 = vadd.f32 %v326, %v712
        %v1099 = vadd.f32 %v327, %v713
        %v1100 = vadd.f32 %v328, %v714
        %v1101 = vadd.f32 %v329, %v715
        %v1102 = vadd.f32 %v330, %v716
        %v1103 = vadd.f32 %v331, %v717
        %v1104 = vadd.f32 %v332, %v718
        %v1105 = vadd.f32 %v333, %v719
        %v1106 = vadd.f32 %v334, %v720
        %v1107 = vadd.f32 %v335, %v721
        %v1108 = vadd.f32 %v336, %v722
        %v1109 = vadd.f32 %v337, %v723
        %v1110 = vadd.f32 %v338, %v724
        %v1111 = vadd.f32 %v339, %v725
        %v1112 = vadd.f32 %v340, %v726
        %v1113 = vadd.f32 %v341, %v727
        %v1114 = vadd.f32 %v342, %v728
        %v1115 = vadd.f32 %v343, %v729
        %v1116 = vadd.f32 %v344, %v730
        %v1117 = vadd.f32 %v345, %v731
        %v1118 = vadd.f32 %v346, %v732
        %v1119 = vadd.f32 %v347, %v733
        %v1120 = vadd.f32 %v348, %v734
        %v1121 = vadd.f32 %v349, %v735
        %v1122 = vadd.f32 %v350, %v736
        %v1123 = vadd.f32 %v351, %v737
        %v1124 = vadd.f32 %v352, %v738
        %v1125 = vadd.f32 %v353, %v739
        %v1126 = vadd.f32 %v354, %v740
        %v1127 = vadd.f32 %v355, %v741
        %v1128 = vadd.f32 %v356, %v742
        %v1129 = vadd.f32 %v357, %v743
        %v1130 = vadd.f32 %v358, %v744
        %v1131 = vadd.f32 %v359, %v745
        %v1132 = vadd.f32 %v360, %v746
        %v1133 = vadd.f32 %v361, %v747
        %v1134 = vadd.f32 %v362, %v748
        %v1135 = vadd.f32 %v363, %v749
        %v1136 = vadd.f32 %v364, %v750
        %v1137 = vadd.f32 %v365, %v751
        %v1138 = vadd.f32 %v366, %v752
        %v1139 = vadd.f32 %v367, %v753
        %v1140 = vadd.f32 %v368, %v754
        %v1141 = vadd.f32 %v369, %v755
        %v1142 = vadd.f32 %v370, %v756
        %v1143 = vadd.f32 %v371, %v757
        %v1144 = vadd.f32 %v372, %v758
        %v1145 = vadd.f32 %v373, %v759
        %v1146 = vadd.f32 %v374, %v760
        %v1147 = vadd.f32 %v375, %v761
        %v1148 = vadd.f32 %v376, %v762
        %v1149 = vadd.f32 %v377, %v763
        %v1150 = vadd.f32 %v378, %v764
        %v1151 = vadd.f32 %v379, %v765
        %v1152 = vadd.f32 %v380, %v766
        %v1153 = vadd.f32 %v381, %v767
        %v1154 = vadd.f32 %v382, %v768
        %v1155 = vadd.f32 %v383, %v769
        %v1156 = vadd.f32 %v384, %v770
        %v1157 = vadd.f32 %v385, %v771
        %v1158 = vadd.f32 %v386, %v772
        %v1159 = vadd.f32 %v387, %v773
        %v1160 = vadd.f32 %v388, %v774
        %v1161 = vadd.f32 %v389, %v775
        %v1162 = vadd.f32 %v390, %v776
        %v1163 = vadd.f32 %v391, %v777
        %v1164 = vadd.f32 %v392, %v778
        %v1165 = vadd.f32 %v393, %v779
        %v1166 = vadd.f32 %v394, %v780
        %v1167 = vadd.f32 %v395, %v781
        %v1168 = vadd.f32 %v396, %v782
        %v1169 = vadd.f32 %v397, %v783
        %v1170 = vadd.f32 %v398, %v784
        %v1171 = vadd.f32 %v399, %v785
        %v1172 = vadd.f32 %v400, %v786
        %v1173 = vadd.f32 %v401, %v787
        %v1174 = vadd.f32 %v402, %v788
        %v1175 = vadd.f32 %v403, %v789
        %v1176 = vadd.f32 %v404, %v790
        %v1177 = vadd.f32 %v405, %v791
        %v1178 = vadd.f32 %v406, %v792
        %v1179 = vadd.f32 %v407, %v793
        %v1180 = vadd.f32 %v408, %v794
        %v1181 = vadd.f32 %v409, %v795
        %v1182 = vadd.f32 %v410, %v796
        %v1183 = vadd.f32 %v411, %v797
        %v1184 = vadd.f32 %v412, %v798
        %v1185 = vadd.f32 %v413, %v799
        %v1186 = vadd.f32 %v414, %v800
        %v1187 = vadd.f32 %v415, %v801
        %v1188 = vadd.f32 %v416, %v802
        %v1189 = vadd.f32 %v417, %v803
        %v1190 = vadd.f32 %v418, %v804
        %v1191 = vadd.f32 %v419, %v805
        %v1192 = vadd.f32 %v420, %v806
        %v1193 = vadd.f32 %v421, %v807
        %v1194 = vadd.f32 %v422, %v808
        %v1195 = vadd.f32 %v423, %v809
        %v1196 = vadd.f32 %v424, %v810
        %v1197 = vadd.f32 %v425, %v811
        %v1198 = vadd.f32 %v426, %v812
        %v1199 = vadd.f32 %v427, %v813
        %v1200 = vadd.f32 %v428, %v814
        %v1201 = vadd.f32 %v429, %v815
        %v1202 = vadd.f32 %v430, %v816
        %v1203 = vadd.f32 %v431, %v817
        %v1204 = vadd.f32 %v432, %v818
        %v1205 = vadd.f32 %v433, %v819
        %v1206 = vadd.f32 %v434, %v820
        %v1207 = vadd.f32 %v435, %v821
        %v1208 = vadd.f32 %v436, %v822
        %v1209 = vadd.f32 %v437, %v823
        %v1210 = vadd.f32 %v438, %v824
        %v1211 = vadd.f32 %v439, %v825
        %v1212 = vadd.f32 %v440, %v826
        %v1213 = vadd.f32 %v441, %v827
        %v1214 = vadd.f32 %v442, %v828
        %v1215 = vadd.f32 %v443, %v829
        %v1216 = vadd.f32 %v444, %v830
        %v1217 = vadd.f32 %v445, %v831
        %v1218 = vadd.f32 %v446, %v832
        %v1219 = vadd.f32 %v447, %v833
        %v1220 = vadd.f32 %v448, %v834
        %v1221 = vadd.f32 %v449, %v835
        %v1222 = vadd.f32 %v450, %v836
        %v1223 = vadd.f32 %v451, %v837
        %v1224 = vadd.f32 %v452, %v838
        %v1225 = vadd.f32 %v453, %v839
        %v1226 = vadd.f32 %v454, %v840
        %v1227 = vadd.f32 %v455, %v841
        %v1228 = vadd.f32 %v456, %v842
        %v1229 = vadd.f32 %v457, %v843
        %v1230 = vadd.f32 %v458, %v844
        %v1231 = vadd.f32 %v459, %v845
        %v1232 = vadd.f32 %v460, %v846
        %v1233 = vadd.f32 %v461, %v847
        %v1234 = vadd.f32 %v462, %v848
        %v1235 = vadd.f32 %v463, %v849
        %v1236 = vadd.f32 %v464, %v850
        %v1237 = vadd.f32 %v465, %v851
        %v1238 = vadd.f32 %v466, %v852
        %v1239 = vadd.f32 %v467, %v853
        %v1240 = vadd.f32 %v468, %v854
        %v1241 = vadd.f32 %v469, %v855
        %v1242 = vadd.f32 %v470, %v856
        %v1243 = vadd.f32 %v471, %v857
        %v1244 = vadd.f32 %v472, %v858
        %v1245 = vadd.f32 %v473, %v859
        %v1246 = vadd.f32 %v474, %v860
        %v1247 = vadd.f32 %v475, %v861
        %v1248 = vadd.f32 %v476, %v862
        %v1249 = vadd.f32 %v477, %v863
        %v1250 = vadd.f32 %v478, %v864
        %v1251 = vadd.f32 %v479, %v865
        %v1252 = vadd.f32 %v480, %v866
        %v1253 = vadd.f32 %v481, %v867
        %v1254 = vadd.f32 %v482, %v868
        %v1255 = vadd.f32 %v483, %v869
        %v1256 = vadd.f32 %v484, %v870
        %v1257 = vadd.f32 %v485, %v871
        %v1258 = vadd.f32 %v486, %v872
        %v1259 = vadd.f32 %v487, %v873
        %v1260 = vadd.f32 %v488, %v874
        %v1261 = vadd.f32 %v489, %v875
        %v1262 = vadd.f32 %v490, %v876
        %v1263 = vadd.f32 %v491, %v877
        %v1264 = vadd.f32 %v492, %v878
        %v1265 = vadd.f32 %v493, %v879
        %v1266 = vadd.f32 %v494, %v880
        %v1267 = vadd.f32 %v495, %v881
        %v1268 = vadd.f32 %v496, %v882
        %v1269 = vadd.f32 %v497, %v883
        %v1270 = vadd.f32 %v498, %v884
        %v1271 = vadd.f32 %v499, %v885
        %v1272 = vadd.f32 %v500, %v886
        %v1273 = vadd.f32 %v501, %v887
        %v1274 = vadd.f32 %v502, %v888
        %v1275 = vadd.f32 %v503, %v889
        %v1276 = vadd.f32 %v504, %v890
        %v1277 = vadd.f32 %v505, %v891
        %v1278 = vadd.f32 %v506, %v892
        %v1279 = vadd.f32 %v507, %v893
        %v1280 = vadd.f32 %v508, %v894
        %v1281 = vadd.f32 %v509, %v895
        %v1282 = vadd.f32 %v510, %v896
        %v1283 = vadd.f32 %v511, %v897
        %v1284 = vadd.f32 %v512, %v898
        %v1285 = vadd.f32 %v513, %v899
        %v1286 = vadd.f32 %v514, %v900
        %v1287 = vadd.f32 %v515, %v901
        %v1288 = vadd.f32 %v516, %v902
        %v1289 = vadd.f32 %v517, %v903
        %v1290 = vadd.f32 %v518, %v904
        %v1291 = vadd.f32 %v519, %v905
        %v1292 = vadd.f32 %v520, %v906
        %v1293 = vadd.f32 %v521, %v907
        %v1294 = vadd.f32 %v522, %v908
        %v1295 = vadd.f32 %v523, %v909
        %v1296 = vadd.f32 %v524, %v910
        %v1297 = vadd.f32 %v525, %v911
        %v1298 = vadd.f32 %v526, %v912
        %v1299 = vadd.f32 %v527, %v913
        %v1300 = vadd.f32 %v528, %v914
        %v1301 = vadd.f32 %v529, %v915
        %v1302 = vadd.f32 %v530, %v916
        %v1303 = vadd.f32 %v531, %v917
        %v1304 = vadd.f32 %v532, %v918
        %v1305 = vadd.f32 %v533, %v919
        %v1306 = vadd.f32 %v534, %v920
        %v1307 = vadd.f32 %v535, %v921
        %v1308 = vadd.f32 %v536, %v922
        %v1309 = vadd.f32 %v537, %v923
        %v1310 = vadd.f32 %v538, %v924
        %v1311 = vadd.f32 %v539, %v925
        %v1312 = vadd.f32 %v540, %v926
        %v1313 = vadd.f32 %v541, %v927
        %v1314 = vadd.f32 %v542, %v928
        %v1315 = vadd.f32 %v543, %v929
        %v1316 = vadd.f32 %v544, %v930
        %v1317 = vadd.f32 %v545, %v931
        %v1318 = vadd.f32 %v546, %v932
        %v1319 = vadd.f32 %v547, %v933
        %v1320 = vadd.f32 %v548, %v934
        %v1321 = vadd.f32 %v549, %v935
        %v1322 = vadd.f32 %v550, %v936
        %v1323 = vadd.f32 %v551, %v937
        %v1324 = vadd.f32 %v552, %v938
        %v1325 = vadd.f32 %v553, %v939
        %v1326 = vadd.f32 %v554, %v940
        %v1327 = vadd.f32 %v555, %v941
        %v1328 = vadd.f32 %v556, %v942
        %v1329 = vadd.f32 %v557, %v943
        %v1330 = vadd.f32 %v558, %v944
        %v1331 = vadd.f32 %v559, %v945
        %v1332 = vadd.f32 %v560, %v946
        %v1333 = vadd.f32 %v561, %v947
        %v1334 = vadd.f32 %v562, %v948
        %v1335 = vadd.f32 %v563, %v949
        %v1336 = vadd.f32 %v564, %v950
        %v1337 = vadd.f32 %v565, %v951
        %v1338 = vadd.f32 %v566, %v952
        %v1339 = vadd.f32 %v567, %v953
        %v1340 = vadd.f32 %v568, %v954
        %v1341 = vadd.f32 %v569, %v955
        %v1342 = vadd.f32 %v570, %v956
        %v1343 = vadd.f32 %v571, %v957
        %v1344 = vadd.f32 %v572, %v958
        %v1345 = vadd.f32 %v573, %v959
        %v1346 = vadd.f32 %v574, %v960
        %v1347 = vadd.f32 %v575, %v961
        %v1348 = vadd.f32 %v576, %v962
        %v1349 = vadd.f32 %v577, %v963
        %v1350 = vadd.f32 %v578, %v964
        %v1351 = vadd.f32 %v579, %v965
        %v1352 = vadd.f32 %v580, %v966
        %v1353 = vadd.f32 %v581, %v967
        %v1354 = vadd.f32 %v582, %v968
        %v1355 = vadd.f32 %v583, %v969
        %v1356 = vadd.f32 %v584, %v970
        %v1357 = vadd.f32 %v585, %v971
        %v1358 = vadd.f32 %v586, %v972
        %v1359 = vadd.f32 %v587, %v973
        %v1360 = vadd.f32 %v588, %v974
        %v1361 = vadd.f32 %v589, %v975
        %v1362 = vadd.f32 %v590, %v976
        %v1363 = vadd.f32 %v591, %v977
        %v1364 = vadd.f32 %v592, %v978
        %v1365 = vadd.f32 %v593, %v979
        %v1366 = vadd.f32 %v594, %v980
        %v1367 = vadd.f32 %v595, %v981
        %v1368 = vadd.f32 %v596, %v982
        %v1369 = vadd.f32 %v597, %v983
        %v1370 = vadd.f32 %v598, %v984
        %v1371 = vadd.f32 %v599, %v985
        %v1372 = vadd.f32 %v600, %v986
        %v1373 = vadd.f32 %v601, %v987
        %v1374 = vadd.f32 %v602, %v988
        %v1375 = vadd.f32 %v603, %v989
        %v1376 = vadd.f32 %v604, %v990
        %v1377 = vadd.f32 %v605, %v991
        %v1378 = vadd.f32 %v606, %v992
        %v1379 = vadd.f32 %v607, %v993
        %v1380 = vadd.f32 %v608, %v994
        %v1381 = vadd.f32 %v609, %v995
        %v1382 = vadd.f32 %v610, %v996
        %v1383 = vadd.f32 %v611, %v997
        %v1384 = vadd.f32 %v612, %v998
        %v1385 = vadd.f32 %v613, %v999
        %v1386 = vadd.f32 %v614, %v1000
        %1387 = vst [vmem:[%s213] sm:$0xff] %v1001
        %1388 = vst [vmem:[%s213 + $0x8] sm:$0xff] %v1002
        %1389 = vst [vmem:[%s213 + $0x10] sm:$0xff] %v1003
        %1390 = vst [vmem:[%s213 + $0x18] sm:$0xff] %v1004
        %1391 = vst [vmem:[%s213 + $0x20] sm:$0xff] %v1005
        %1392 = vst [vmem:[%s213 + $0x28] sm:$0xff] %v1006
        %1393 = vst [vmem:[%s213 + $0x30] sm:$0xff] %v1007
        %1394 = vst [vmem:[%s213 + $0x38] sm:$0xff] %v1008
        %1395 = vst [vmem:[%s213 + $0x40] sm:$0xff] %v1009
        %1396 = vst [vmem:[%s213 + $0x48] sm:$0xff] %v1010
        %1397 = vst [vmem:[%s213 + $0x50] sm:$0xff] %v1011
        %1398 = vst [vmem:[%s213 + $0x58] sm:$0xff] %v1012
        %1399 = vst [vmem:[%s213 + $0x60] sm:$0xff] %v1013
        %1400 = vst [vmem:[%s213 + $0x68] sm:$0xff] %v1014
        %1401 = vst [vmem:[%s213 + $0x70] sm:$0xff] %v1015
        %1402 = vst [vmem:[%s213 + $0x78] sm:$0xff] %v1016
        %1403 = vst [vmem:[%s213 + $0x80] sm:$0xff] %v1017
        %1404 = vst [vmem:[%s213 + $0x88] sm:$0xff] %v1018
        %1405 = vst [vmem:[%s213 + $0x90] sm:$0xff] %v1019
        %1406 = vst [vmem:[%s213 + $0x98] sm:$0xff] %v1020
        %1407 = vst [vmem:[%s213 + $0xa0] sm:$0xff] %v1021
        %1408 = vst [vmem:[%s213 + $0xa8] sm:$0xff] %v1022
        %1409 = vst [vmem:[%s213 + $0xb0] sm:$0xff] %v1023
        %1410 = vst [vmem:[%s213 + $0xb8] sm:$0xff] %v1024
        %1411 = vst [vmem:[%s213 + $0xc0] sm:$0xff] %v1025
        %1412 = vst [vmem:[%s213 + $0xc8] sm:$0xff] %v1026
        %1413 = vst [vmem:[%s213 + $0xd0] sm:$0xff] %v1027
        %1414 = vst [vmem:[%s213 + $0xd8] sm:$0xff] %v1028
        %1415 = vst [vmem:[%s213 + $0xe0] sm:$0xff] %v1029
        %1416 = vst [vmem:[%s213 + $0xe8] sm:$0xff] %v1030
        %1417 = vst [vmem:[%s213 + $0xf0] sm:$0xff] %v1031
        %1418 = vst [vmem:[%s213 + $0xf8] sm:$0xff] %v1032
        %1419 = vst [vmem:[%s213 + $0x100] sm:$0xff] %v1033
        %1420 = vst [vmem:[%s213 + $0x108] sm:$0xff] %v1034
        %1421 = vst [vmem:[%s213 + $0x110] sm:$0xff] %v1035
        %1422 = vst [vmem:[%s213 + $0x118] sm:$0xff] %v1036
        %1423 = vst [vmem:[%s213 + $0x120] sm:$0xff] %v1037
        %1424 = vst [vmem:[%s213 + $0x128] sm:$0xff] %v1038
        %1425 = vst [vmem:[%s213 + $0x130] sm:$0xff] %v1039
        %1426 = vst [vmem:[%s213 + $0x138] sm:$0xff] %v1040
        %1427 = vst [vmem:[%s213 + $0x140] sm:$0xff] %v1041
        %1428 = vst [vmem:[%s213 + $0x148] sm:$0xff] %v1042
        %1429 = vst [vmem:[%s213 + $0x150] sm:$0xff] %v1043
        %1430 = vst [vmem:[%s213 + $0x158] sm:$0xff] %v1044
        %1431 = vst [vmem:[%s213 + $0x160] sm:$0xff] %v1045
        %1432 = vst [vmem:[%s213 + $0x168] sm:$0xff] %v1046
        %1433 = vst [vmem:[%s213 + $0x170] sm:$0xff] %v1047
        %1434 = vst [vmem:[%s213 + $0x178] sm:$0xff] %v1048
        %1435 = vst [vmem:[%s213 + $0x180] sm:$0xff] %v1049
        %1436 = vst [vmem:[%s213 + $0x188] sm:$0xff] %v1050
        %1437 = vst [vmem:[%s213 + $0x190] sm:$0xff] %v1051
        %1438 = vst [vmem:[%s213 + $0x198] sm:$0xff] %v1052
        %1439 = vst [vmem:[%s213 + $0x1a0] sm:$0xff] %v1053
        %1440 = vst [vmem:[%s213 + $0x1a8] sm:$0xff] %v1054
        %1441 = vst [vmem:[%s213 + $0x1b0] sm:$0xff] %v1055
        %1442 = vst [vmem:[%s213 + $0x1b8] sm:$0xff] %v1056
        %1443 = vst [vmem:[%s213 + $0x1c0] sm:$0xff] %v1057
        %1444 = vst [vmem:[%s213 + $0x1c8] sm:$0xff] %v1058
        %1445 = vst [vmem:[%s213 + $0x1d0] sm:$0xff] %v1059
        %1446 = vst [vmem:[%s213 + $0x1d8] sm:$0xff] %v1060
        %1447 = vst [vmem:[%s213 + $0x1e0] sm:$0xff] %v1061
        %1448 = vst [vmem:[%s213 + $0x1e8] sm:$0xff] %v1062
        %1449 = vst [vmem:[%s213 + $0x1f0] sm:$0xff] %v1063
        %1450 = vst [vmem:[%s213 + $0x1f8] sm:$0xff] %v1064
        %1451 = vst [vmem:[%s213 + $0x200] sm:$0xff] %v1065
        %1452 = vst [vmem:[%s213 + $0x208] sm:$0xff] %v1066
        %1453 = vst [vmem:[%s213 + $0x210] sm:$0xff] %v1067
        %1454 = vst [vmem:[%s213 + $0x218] sm:$0xff] %v1068
        %1455 = vst [vmem:[%s213 + $0x220] sm:$0xff] %v1069
        %1456 = vst [vmem:[%s213 + $0x228] sm:$0xff] %v1070
        %1457 = vst [vmem:[%s213 + $0x230] sm:$0xff] %v1071
        %1458 = vst [vmem:[%s213 + $0x238] sm:$0xff] %v1072
        %1459 = vst [vmem:[%s213 + $0x240] sm:$0xff] %v1073
        %1460 = vst [vmem:[%s213 + $0x248] sm:$0xff] %v1074
        %1461 = vst [vmem:[%s213 + $0x250] sm:$0xff] %v1075
        %1462 = vst [vmem:[%s213 + $0x258] sm:$0xff] %v1076
        %1463 = vst [vmem:[%s213 + $0x260] sm:$0xff] %v1077
        %1464 = vst [vmem:[%s213 + $0x268] sm:$0xff] %v1078
        %1465 = vst [vmem:[%s213 + $0x270] sm:$0xff] %v1079
        %1466 = vst [vmem:[%s213 + $0x278] sm:$0xff] %v1080
        %1467 = vst [vmem:[%s213 + $0x280] sm:$0xff] %v1081
        %1468 = vst [vmem:[%s213 + $0x288] sm:$0xff] %v1082
        %1469 = vst [vmem:[%s213 + $0x290] sm:$0xff] %v1083
        %1470 = vst [vmem:[%s213 + $0x298] sm:$0xff] %v1084
        %1471 = vst [vmem:[%s213 + $0x2a0] sm:$0xff] %v1085
        %1472 = vst [vmem:[%s213 + $0x2a8] sm:$0xff] %v1086
        %1473 = vst [vmem:[%s213 + $0x2b0] sm:$0xff] %v1087
        %1474 = vst [vmem:[%s213 + $0x2b8] sm:$0xff] %v1088
        %1475 = vst [vmem:[%s213 + $0x2c0] sm:$0xff] %v1089
        %1476 = vst [vmem:[%s213 + $0x2c8] sm:$0xff] %v1090
        %1477 = vst [vmem:[%s213 + $0x2d0] sm:$0xff] %v1091
        %1478 = vst [vmem:[%s213 + $0x2d8] sm:$0xff] %v1092
        %1479 = vst [vmem:[%s213 + $0x2e0] sm:$0xff] %v1093
        %1480 = vst [vmem:[%s213 + $0x2e8] sm:$0xff] %v1094
        %1481 = vst [vmem:[%s213 + $0x2f0] sm:$0xff] %v1095
        %1482 = vst [vmem:[%s213 + $0x2f8] sm:$0xff] %v1096
        %1483 = vst [vmem:[%s213 + $0x300] sm:$0xff] %v1097
        %1484 = vst [vmem:[%s213 + $0x308] sm:$0xff] %v1098
        %1485 = vst [vmem:[%s213 + $0x310] sm:$0xff] %v1099
        %1486 = vst [vmem:[%s213 + $0x318] sm:$0xff] %v1100
        %1487 = vst [vmem:[%s213 + $0x320] sm:$0xff] %v1101
        %1488 = vst [vmem:[%s213 + $0x328] sm:$0xff] %v1102
        %1489 = vst [vmem:[%s213 + $0x330] sm:$0xff] %v1103
        %1490 = vst [vmem:[%s213 + $0x338] sm:$0xff] %v1104
        %1491 = vst [vmem:[%s213 + $0x340] sm:$0xff] %v1105
        %1492 = vst [vmem:[%s213 + $0x348] sm:$0xff] %v1106
        %1493 = vst [vmem:[%s213 + $0x350] sm:$0xff] %v1107
        %1494 = vst [vmem:[%s213 + $0x358] sm:$0xff] %v1108
        %1495 = vst [vmem:[%s213 + $0x360] sm:$0xff] %v1109
        %1496 = vst [vmem:[%s213 + $0x368] sm:$0xff] %v1110
        %1497 = vst [vmem:[%s213 + $0x370] sm:$0xff] %v1111
        %1498 = vst [vmem:[%s213 + $0x378] sm:$0xff] %v1112
        %1499 = vst [vmem:[%s213 + $0x380] sm:$0xff] %v1113
        %1500 = vst [vmem:[%s213 + $0x388] sm:$0xff] %v1114
        %1501 = vst [vmem:[%s213 + $0x390] sm:$0xff] %v1115
        %1502 = vst [vmem:[%s213 + $0x398] sm:$0xff] %v1116
        %1503 = vst [vmem:[%s213 + $0x3a0] sm:$0xff] %v1117
        %1504 = vst [vmem:[%s213 + $0x3a8] sm:$0xff] %v1118
        %1505 = vst [vmem:[%s213 + $0x3b0] sm:$0xff] %v1119
        %1506 = vst [vmem:[%s213 + $0x3b8] sm:$0xff] %v1120
        %1507 = vst [vmem:[%s213 + $0x3c0] sm:$0xff] %v1121
        %1508 = vst [vmem:[%s213 + $0x3c8] sm:$0xff] %v1122
        %1509 = vst [vmem:[%s213 + $0x3d0] sm:$0xff] %v1123
        %1510 = vst [vmem:[%s213 + $0x3d8] sm:$0xff] %v1124
        %1511 = vst [vmem:[%s213 + $0x3e0] sm:$0xff] %v1125
        %1512 = vst [vmem:[%s213 + $0x3e8] sm:$0xff] %v1126
        %1513 = vst [vmem:[%s213 + $0x3f0] sm:$0xff] %v1127
        %1514 = vst [vmem:[%s213 + $0x3f8] sm:$0xff] %v1128
        %1515 = vst [vmem:[%s213 + $0x400] sm:$0xff] %v1129
        %1516 = vst [vmem:[%s213 + $0x408] sm:$0xff] %v1130
        %1517 = vst [vmem:[%s213 + $0x410] sm:$0xff] %v1131
        %1518 = vst [vmem:[%s213 + $0x418] sm:$0xff] %v1132
        %1519 = vst [vmem:[%s213 + $0x420] sm:$0xff] %v1133
        %1520 = vst [vmem:[%s213 + $0x428] sm:$0xff] %v1134
        %1521 = vst [vmem:[%s213 + $0x430] sm:$0xff] %v1135
        %1522 = vst [vmem:[%s213 + $0x438] sm:$0xff] %v1136
        %1523 = vst [vmem:[%s213 + $0x440] sm:$0xff] %v1137
        %1524 = vst [vmem:[%s213 + $0x448] sm:$0xff] %v1138
        %1525 = vst [vmem:[%s213 + $0x450] sm:$0xff] %v1139
        %1526 = vst [vmem:[%s213 + $0x458] sm:$0xff] %v1140
        %1527 = vst [vmem:[%s213 + $0x460] sm:$0xff] %v1141
        %1528 = vst [vmem:[%s213 + $0x468] sm:$0xff] %v1142
        %1529 = vst [vmem:[%s213 + $0x470] sm:$0xff] %v1143
        %1530 = vst [vmem:[%s213 + $0x478] sm:$0xff] %v1144
        %1531 = vst [vmem:[%s213 + $0x480] sm:$0xff] %v1145
        %1532 = vst [vmem:[%s213 + $0x488] sm:$0xff] %v1146
        %1533 = vst [vmem:[%s213 + $0x490] sm:$0xff] %v1147
        %1534 = vst [vmem:[%s213 + $0x498] sm:$0xff] %v1148
        %1535 = vst [vmem:[%s213 + $0x4a0] sm:$0xff] %v1149
        %1536 = vst [vmem:[%s213 + $0x4a8] sm:$0xff] %v1150
        %1537 = vst [vmem:[%s213 + $0x4b0] sm:$0xff] %v1151
        %1538 = vst [vmem:[%s213 + $0x4b8] sm:$0xff] %v1152
        %1539 = vst [vmem:[%s213 + $0x4c0] sm:$0xff] %v1153
        %1540 = vst [vmem:[%s213 + $0x4c8] sm:$0xff] %v1154
        %1541 = vst [vmem:[%s213 + $0x4d0] sm:$0xff] %v1155
        %1542 = vst [vmem:[%s213 + $0x4d8] sm:$0xff] %v1156
        %1543 = vst [vmem:[%s213 + $0x4e0] sm:$0xff] %v1157
        %1544 = vst [vmem:[%s213 + $0x4e8] sm:$0xff] %v1158
        %1545 = vst [vmem:[%s213 + $0x4f0] sm:$0xff] %v1159
        %1546 = vst [vmem:[%s213 + $0x4f8] sm:$0xff] %v1160
        %1547 = vst [vmem:[%s213 + $0x500] sm:$0xff] %v1161
        %1548 = vst [vmem:[%s213 + $0x508] sm:$0xff] %v1162
        %1549 = vst [vmem:[%s213 + $0x510] sm:$0xff] %v1163
        %1550 = vst [vmem:[%s213 + $0x518] sm:$0xff] %v1164
        %1551 = vst [vmem:[%s213 + $0x520] sm:$0xff] %v1165
        %1552 = vst [vmem:[%s213 + $0x528] sm:$0xff] %v1166
        %1553 = vst [vmem:[%s213 + $0x530] sm:$0xff] %v1167
        %1554 = vst [vmem:[%s213 + $0x538] sm:$0xff] %v1168
        %1555 = vst [vmem:[%s213 + $0x540] sm:$0xff] %v1169
        %1556 = vst [vmem:[%s213 + $0x548] sm:$0xff] %v1170
        %1557 = vst [vmem:[%s213 + $0x550] sm:$0xff] %v1171
        %1558 = vst [vmem:[%s213 + $0x558] sm:$0xff] %v1172
        %1559 = vst [vmem:[%s213 + $0x560] sm:$0xff] %v1173
        %1560 = vst [vmem:[%s213 + $0x568] sm:$0xff] %v1174
        %1561 = vst [vmem:[%s213 + $0x570] sm:$0xff] %v1175
        %1562 = vst [vmem:[%s213 + $0x578] sm:$0xff] %v1176
        %1563 = vst [vmem:[%s213 + $0x580] sm:$0xff] %v1177
        %1564 = vst [vmem:[%s213 + $0x588] sm:$0xff] %v1178
        %1565 = vst [vmem:[%s213 + $0x590] sm:$0xff] %v1179
        %1566 = vst [vmem:[%s213 + $0x598] sm:$0xff] %v1180
        %1567 = vst [vmem:[%s213 + $0x5a0] sm:$0xff] %v1181
        %1568 = vst [vmem:[%s213 + $0x5a8] sm:$0xff] %v1182
        %1569 = vst [vmem:[%s213 + $0x5b0] sm:$0xff] %v1183
        %1570 = vst [vmem:[%s213 + $0x5b8] sm:$0xff] %v1184
        %1571 = vst [vmem:[%s213 + $0x5c0] sm:$0xff] %v1185
        %1572 = vst [vmem:[%s213 + $0x5c8] sm:$0xff] %v1186
        %1573 = vst [vmem:[%s213 + $0x5d0] sm:$0xff] %v1187
        %1574 = vst [vmem:[%s213 + $0x5d8] sm:$0xff] %v1188
        %1575 = vst [vmem:[%s213 + $0x5e0] sm:$0xff] %v1189
        %1576 = vst [vmem:[%s213 + $0x5e8] sm:$0xff] %v1190
        %1577 = vst [vmem:[%s213 + $0x5f0] sm:$0xff] %v1191
        %1578 = vst [vmem:[%s213 + $0x5f8] sm:$0xff] %v1192
        %1579 = vst [vmem:[%s213 + $0x600] sm:$0xff] %v1193
        %1580 = vst [vmem:[%s213 + $0x608] sm:$0xff] %v1194
        %1581 = vst [vmem:[%s213 + $0x610] sm:$0xff] %v1195
        %1582 = vst [vmem:[%s213 + $0x618] sm:$0xff] %v1196
        %1583 = vst [vmem:[%s213 + $0x620] sm:$0xff] %v1197
        %1584 = vst [vmem:[%s213 + $0x628] sm:$0xff] %v1198
        %1585 = vst [vmem:[%s213 + $0x630] sm:$0xff] %v1199
        %1586 = vst [vmem:[%s213 + $0x638] sm:$0xff] %v1200
        %1587 = vst [vmem:[%s213 + $0x640] sm:$0xff] %v1201
        %1588 = vst [vmem:[%s213 + $0x648] sm:$0xff] %v1202
        %1589 = vst [vmem:[%s213 + $0x650] sm:$0xff] %v1203
        %1590 = vst [vmem:[%s213 + $0x658] sm:$0xff] %v1204
        %1591 = vst [vmem:[%s213 + $0x660] sm:$0xff] %v1205
        %1592 = vst [vmem:[%s213 + $0x668] sm:$0xff] %v1206
        %1593 = vst [vmem:[%s213 + $0x670] sm:$0xff] %v1207
        %1594 = vst [vmem:[%s213 + $0x678] sm:$0xff] %v1208
        %1595 = vst [vmem:[%s213 + $0x680] sm:$0xff] %v1209
        %1596 = vst [vmem:[%s213 + $0x688] sm:$0xff] %v1210
        %1597 = vst [vmem:[%s213 + $0x690] sm:$0xff] %v1211
        %1598 = vst [vmem:[%s213 + $0x698] sm:$0xff] %v1212
        %1599 = vst [vmem:[%s213 + $0x6a0] sm:$0xff] %v1213
        %1600 = vst [vmem:[%s213 + $0x6a8] sm:$0xff] %v1214
        %1601 = vst [vmem:[%s213 + $0x6b0] sm:$0xff] %v1215
        %1602 = vst [vmem:[%s213 + $0x6b8] sm:$0xff] %v1216
        %1603 = vst [vmem:[%s213 + $0x6c0] sm:$0xff] %v1217
        %1604 = vst [vmem:[%s213 + $0x6c8] sm:$0xff] %v1218
        %1605 = vst [vmem:[%s213 + $0x6d0] sm:$0xff] %v1219
        %1606 = vst [vmem:[%s213 + $0x6d8] sm:$0xff] %v1220
        %1607 = vst [vmem:[%s213 + $0x6e0] sm:$0xff] %v1221
        %1608 = vst [vmem:[%s213 + $0x6e8] sm:$0xff] %v1222
        %1609 = vst [vmem:[%s213 + $0x6f0] sm:$0xff] %v1223
        %1610 = vst [vmem:[%s213 + $0x6f8] sm:$0xff] %v1224
        %1611 = vst [vmem:[%s213 + $0x700] sm:$0xff] %v1225
        %1612 = vst [vmem:[%s213 + $0x708] sm:$0xff] %v1226
        %1613 = vst [vmem:[%s213 + $0x710] sm:$0xff] %v1227
        %1614 = vst [vmem:[%s213 + $0x718] sm:$0xff] %v1228
        %1615 = vst [vmem:[%s213 + $0x720] sm:$0xff] %v1229
        %1616 = vst [vmem:[%s213 + $0x728] sm:$0xff] %v1230
        %1617 = vst [vmem:[%s213 + $0x730] sm:$0xff] %v1231
        %1618 = vst [vmem:[%s213 + $0x738] sm:$0xff] %v1232
        %1619 = vst [vmem:[%s213 + $0x740] sm:$0xff] %v1233
        %1620 = vst [vmem:[%s213 + $0x748] sm:$0xff] %v1234
        %1621 = vst [vmem:[%s213 + $0x750] sm:$0xff] %v1235
        %1622 = vst [vmem:[%s213 + $0x758] sm:$0xff] %v1236
        %1623 = vst [vmem:[%s213 + $0x760] sm:$0xff] %v1237
        %1624 = vst [vmem:[%s213 + $0x768] sm:$0xff] %v1238
        %1625 = vst [vmem:[%s213 + $0x770] sm:$0xff] %v1239
        %1626 = vst [vmem:[%s213 + $0x778] sm:$0xff] %v1240
        %1627 = vst [vmem:[%s213 + $0x780] sm:$0xff] %v1241
        %1628 = vst [vmem:[%s213 + $0x788] sm:$0xff] %v1242
        %1629 = vst [vmem:[%s213 + $0x790] sm:$0xff] %v1243
        %1630 = vst [vmem:[%s213 + $0x798] sm:$0xff] %v1244
        %1631 = vst [vmem:[%s213 + $0x7a0] sm:$0xff] %v1245
        %1632 = vst [vmem:[%s213 + $0x7a8] sm:$0xff] %v1246
        %1633 = vst [vmem:[%s213 + $0x7b0] sm:$0xff] %v1247
        %1634 = vst [vmem:[%s213 + $0x7b8] sm:$0xff] %v1248
        %1635 = vst [vmem:[%s213 + $0x7c0] sm:$0xff] %v1249
        %1636 = vst [vmem:[%s213 + $0x7c8] sm:$0xff] %v1250
        %1637 = vst [vmem:[%s213 + $0x7d0] sm:$0xff] %v1251
        %1638 = vst [vmem:[%s213 + $0x7d8] sm:$0xff] %v1252
        %1639 = vst [vmem:[%s213 + $0x7e0] sm:$0xff] %v1253
        %1640 = vst [vmem:[%s213 + $0x7e8] sm:$0xff] %v1254
        %1641 = vst [vmem:[%s213 + $0x7f0] sm:$0xff] %v1255
        %1642 = vst [vmem:[%s213 + $0x7f8] sm:$0xff] %v1256
        %1643 = vst [vmem:[%s213 + $0x800] sm:$0xff] %v1257
        %1644 = vst [vmem:[%s213 + $0x808] sm:$0xff] %v1258
        %1645 = vst [vmem:[%s213 + $0x810] sm:$0xff] %v1259
        %1646 = vst [vmem:[%s213 + $0x818] sm:$0xff] %v1260
        %1647 = vst [vmem:[%s213 + $0x820] sm:$0xff] %v1261
        %1648 = vst [vmem:[%s213 + $0x828] sm:$0xff] %v1262
        %1649 = vst [vmem:[%s213 + $0x830] sm:$0xff] %v1263
        %1650 = vst [vmem:[%s213 + $0x838] sm:$0xff] %v1264
        %1651 = vst [vmem:[%s213 + $0x840] sm:$0xff] %v1265
        %1652 = vst [vmem:[%s213 + $0x848] sm:$0xff] %v1266
        %1653 = vst [vmem:[%s213 + $0x850] sm:$0xff] %v1267
        %1654 = vst [vmem:[%s213 + $0x858] sm:$0xff] %v1268
        %1655 = vst [vmem:[%s213 + $0x860] sm:$0xff] %v1269
        %1656 = vst [vmem:[%s213 + $0x868] sm:$0xff] %v1270
        %1657 = vst [vmem:[%s213 + $0x870] sm:$0xff] %v1271
        %1658 = vst [vmem:[%s213 + $0x878] sm:$0xff] %v1272
        %1659 = vst [vmem:[%s213 + $0x880] sm:$0xff] %v1273
        %1660 = vst [vmem:[%s213 + $0x888] sm:$0xff] %v1274
        %1661 = vst [vmem:[%s213 + $0x890] sm:$0xff] %v1275
        %1662 = vst [vmem:[%s213 + $0x898] sm:$0xff] %v1276
        %1663 = vst [vmem:[%s213 + $0x8a0] sm:$0xff] %v1277
        %1664 = vst [vmem:[%s213 + $0x8a8] sm:$0xff] %v1278
        %1665 = vst [vmem:[%s213 + $0x8b0] sm:$0xff] %v1279
        %1666 = vst [vmem:[%s213 + $0x8b8] sm:$0xff] %v1280
        %1667 = vst [vmem:[%s213 + $0x8c0] sm:$0xff] %v1281
        %1668 = vst [vmem:[%s213 + $0x8c8] sm:$0xff] %v1282
        %1669 = vst [vmem:[%s213 + $0x8d0] sm:$0xff] %v1283
        %1670 = vst [vmem:[%s213 + $0x8d8] sm:$0xff] %v1284
        %1671 = vst [vmem:[%s213 + $0x8e0] sm:$0xff] %v1285
        %1672 = vst [vmem:[%s213 + $0x8e8] sm:$0xff] %v1286
        %1673 = vst [vmem:[%s213 + $0x8f0] sm:$0xff] %v1287
        %1674 = vst [vmem:[%s213 + $0x8f8] sm:$0xff] %v1288
        %1675 = vst [vmem:[%s213 + $0x900] sm:$0xff] %v1289
        %1676 = vst [vmem:[%s213 + $0x908] sm:$0xff] %v1290
        %1677 = vst [vmem:[%s213 + $0x910] sm:$0xff] %v1291
        %1678 = vst [vmem:[%s213 + $0x918] sm:$0xff] %v1292
        %1679 = vst [vmem:[%s213 + $0x920] sm:$0xff] %v1293
        %1680 = vst [vmem:[%s213 + $0x928] sm:$0xff] %v1294
        %1681 = vst [vmem:[%s213 + $0x930] sm:$0xff] %v1295
        %1682 = vst [vmem:[%s213 + $0x938] sm:$0xff] %v1296
        %1683 = vst [vmem:[%s213 + $0x940] sm:$0xff] %v1297
        %1684 = vst [vmem:[%s213 + $0x948] sm:$0xff] %v1298
        %1685 = vst [vmem:[%s213 + $0x950] sm:$0xff] %v1299
        %1686 = vst [vmem:[%s213 + $0x958] sm:$0xff] %v1300
        %1687 = vst [vmem:[%s213 + $0x960] sm:$0xff] %v1301
        %1688 = vst [vmem:[%s213 + $0x968] sm:$0xff] %v1302
        %1689 = vst [vmem:[%s213 + $0x970] sm:$0xff] %v1303
        %1690 = vst [vmem:[%s213 + $0x978] sm:$0xff] %v1304
        %1691 = vst [vmem:[%s213 + $0x980] sm:$0xff] %v1305
        %1692 = vst [vmem:[%s213 + $0x988] sm:$0xff] %v1306
        %1693 = vst [vmem:[%s213 + $0x990] sm:$0xff] %v1307
        %1694 = vst [vmem:[%s213 + $0x998] sm:$0xff] %v1308
        %1695 = vst [vmem:[%s213 + $0x9a0] sm:$0xff] %v1309
        %1696 = vst [vmem:[%s213 + $0x9a8] sm:$0xff] %v1310
        %1697 = vst [vmem:[%s213 + $0x9b0] sm:$0xff] %v1311
        %1698 = vst [vmem:[%s213 + $0x9b8] sm:$0xff] %v1312
        %1699 = vst [vmem:[%s213 + $0x9c0] sm:$0xff] %v1313
        %1700 = vst [vmem:[%s213 + $0x9c8] sm:$0xff] %v1314
        %1701 = vst [vmem:[%s213 + $0x9d0] sm:$0xff] %v1315
        %1702 = vst [vmem:[%s213 + $0x9d8] sm:$0xff] %v1316
        %1703 = vst [vmem:[%s213 + $0x9e0] sm:$0xff] %v1317
        %1704 = vst [vmem:[%s213 + $0x9e8] sm:$0xff] %v1318
        %1705 = vst [vmem:[%s213 + $0x9f0] sm:$0xff] %v1319
        %1706 = vst [vmem:[%s213 + $0x9f8] sm:$0xff] %v1320
        %1707 = vst [vmem:[%s213 + $0xa00] sm:$0xff] %v1321
        %1708 = vst [vmem:[%s213 + $0xa08] sm:$0xff] %v1322
        %1709 = vst [vmem:[%s213 + $0xa10] sm:$0xff] %v1323
        %1710 = vst [vmem:[%s213 + $0xa18] sm:$0xff] %v1324
        %1711 = vst [vmem:[%s213 + $0xa20] sm:$0xff] %v1325
        %1712 = vst [vmem:[%s213 + $0xa28] sm:$0xff] %v1326
        %1713 = vst [vmem:[%s213 + $0xa30] sm:$0xff] %v1327
        %1714 = vst [vmem:[%s213 + $0xa38] sm:$0xff] %v1328
        %1715 = vst [vmem:[%s213 + $0xa40] sm:$0xff] %v1329
        %1716 = vst [vmem:[%s213 + $0xa48] sm:$0xff] %v1330
        %1717 = vst [vmem:[%s213 + $0xa50] sm:$0xff] %v1331
        %1718 = vst [vmem:[%s213 + $0xa58] sm:$0xff] %v1332
        %1719 = vst [vmem:[%s213 + $0xa60] sm:$0xff] %v1333
        %1720 = vst [vmem:[%s213 + $0xa68] sm:$0xff] %v1334
        %1721 = vst [vmem:[%s213 + $0xa70] sm:$0xff] %v1335
        %1722 = vst [vmem:[%s213 + $0xa78] sm:$0xff] %v1336
        %1723 = vst [vmem:[%s213 + $0xa80] sm:$0xff] %v1337
        %1724 = vst [vmem:[%s213 + $0xa88] sm:$0xff] %v1338
        %1725 = vst [vmem:[%s213 + $0xa90] sm:$0xff] %v1339
        %1726 = vst [vmem:[%s213 + $0xa98] sm:$0xff] %v1340
        %1727 = vst [vmem:[%s213 + $0xaa0] sm:$0xff] %v1341
        %1728 = vst [vmem:[%s213 + $0xaa8] sm:$0xff] %v1342
        %1729 = vst [vmem:[%s213 + $0xab0] sm:$0xff] %v1343
        %1730 = vst [vmem:[%s213 + $0xab8] sm:$0xff] %v1344
        %1731 = vst [vmem:[%s213 + $0xac0] sm:$0xff] %v1345
        %1732 = vst [vmem:[%s213 + $0xac8] sm:$0xff] %v1346
        %1733 = vst [vmem:[%s213 + $0xad0] sm:$0xff] %v1347
        %1734 = vst [vmem:[%s213 + $0xad8] sm:$0xff] %v1348
        %1735 = vst [vmem:[%s213 + $0xae0] sm:$0xff] %v1349
        %1736 = vst [vmem:[%s213 + $0xae8] sm:$0xff] %v1350
        %1737 = vst [vmem:[%s213 + $0xaf0] sm:$0xff] %v1351
        %1738 = vst [vmem:[%s213 + $0xaf8] sm:$0xff] %v1352
        %1739 = vst [vmem:[%s213 + $0xb00] sm:$0xff] %v1353
        %1740 = vst [vmem:[%s213 + $0xb08] sm:$0xff] %v1354
        %1741 = vst [vmem:[%s213 + $0xb10] sm:$0xff] %v1355
        %1742 = vst [vmem:[%s213 + $0xb18] sm:$0xff] %v1356
        %1743 = vst [vmem:[%s213 + $0xb20] sm:$0xff] %v1357
        %1744 = vst [vmem:[%s213 + $0xb28] sm:$0xff] %v1358
        %1745 = vst [vmem:[%s213 + $0xb30] sm:$0xff] %v1359
        %1746 = vst [vmem:[%s213 + $0xb38] sm:$0xff] %v1360
        %1747 = vst [vmem:[%s213 + $0xb40] sm:$0xff] %v1361
        %1748 = vst [vmem:[%s213 + $0xb48] sm:$0xff] %v1362
        %1749 = vst [vmem:[%s213 + $0xb50] sm:$0xff] %v1363
        %1750 = vst [vmem:[%s213 + $0xb58] sm:$0xff] %v1364
        %1751 = vst [vmem:[%s213 + $0xb60] sm:$0xff] %v1365
        %1752 = vst [vmem:[%s213 + $0xb68] sm:$0xff] %v1366
        %1753 = vst [vmem:[%s213 + $0xb70] sm:$0xff] %v1367
        %1754 = vst [vmem:[%s213 + $0xb78] sm:$0xff] %v1368
        %1755 = vst [vmem:[%s213 + $0xb80] sm:$0xff] %v1369
        %1756 = vst [vmem:[%s213 + $0xb88] sm:$0xff] %v1370
        %1757 = vst [vmem:[%s213 + $0xb90] sm:$0xff] %v1371
        %1758 = vst [vmem:[%s213 + $0xb98] sm:$0xff] %v1372
        %1759 = vst [vmem:[%s213 + $0xba0] sm:$0xff] %v1373
        %1760 = vst [vmem:[%s213 + $0xba8] sm:$0xff] %v1374
        %1761 = vst [vmem:[%s213 + $0xbb0] sm:$0xff] %v1375
        %1762 = vst [vmem:[%s213 + $0xbb8] sm:$0xff] %v1376
        %1763 = vst [vmem:[%s213 + $0xbc0] sm:$0xff] %v1377
        %1764 = vst [vmem:[%s213 + $0xbc8] sm:$0xff] %v1378
        %1765 = vst [vmem:[%s213 + $0xbd0] sm:$0xff] %v1379
        %1766 = vst [vmem:[%s213 + $0xbd8] sm:$0xff] %v1380
        %1767 = vst [vmem:[%s213 + $0xbe0] sm:$0xff] %v1381
        %1768 = vst [vmem:[%s213 + $0xbe8] sm:$0xff] %v1382
        %1769 = vst [vmem:[%s213 + $0xbf0] sm:$0xff] %v1383
        %1770 = vst [vmem:[%s213 + $0xbf8] sm:$0xff] %v1384
        %1771 = vst [vmem:[%s213 + $0xc00] sm:$0xff] %v1385
        %1772 = vst [vmem:[%s213 + $0xc08] sm:$0xff] %v1386
        %s1773 = sand.u32 %s82, 1
        %s1774 = scalar_lea.sflag [#allocation4], %s1773
        %s1775 = sand.u32 %s82, 1
        %s1776 = smul.addr %s1775, 3088
        %s1777 = scalar_lea.vmem [#allocation7], %s1776
        // Predicated region
        $region37: #{tpu_custom_call.1} parent=27 // pred_check
          %p1778 = pneg %p92
        $region38: #{tpu_custom_call.1} parent=27 // pred_check_branch
          %1780 = sbr.rel (%p1778) target = $region40
        $region39: #{tpu_custom_call.1} parent=27 // pred_region
          %s1781 = smul.u32 386, %s22
          %s1782 = ssub.s32 771, %s1781
          %p1783 = scmp.lt.s32.totalorder %s1782, 386
          %s1784 = scalar_select %p1783, %s1782, 386
          %s1785 = smul.u32 128, %s1784
          %s1787 = ssub.s32 49408, %s1785
          %1788 = vsyncadd %s1774, %s1787
          %p1789 = scmp.ne.s32.totalorder 0, %s1785
          %s1790 = smul.addr %s1781, 128
          %s1791 = scalar_lea.hbm %s2, %s1790
          %s1792 = smul.u32 8, %s1784
          %s1793 = sshll.u32 %s1777, 4
          %s1794 = int_to_ptr.vmem [resolvable:$true] %s1793
          %s1795 = sshll.u32 %s1792, 4
          %1799 = dma.vmem_to_hbm [thread:$0]  (%p1789), %s1794, %s1795, %s1791, %s1774, 128, 128, 8
        $region40: #{tpu_custom_call.1} parent=27 // pred_fallthru
          _
      $region28: #{tpu_custom_call.1} parent=5 // pred_fallthru
        _
      %p1800 = scmp.le.s32.totalorder 2, %s17
      // Predicated region
      $region41: #{tpu_custom_call.1} parent=5 // pred_check
        %p1801 = pneg %p1800
      $region42: #{tpu_custom_call.1} parent=5 // pred_check_branch
        %1803 = sbr.rel (%p1801) target = $region44
      $region43: #{tpu_custom_call.1} parent=5 // pred_region
        %s1804 = ssub.s32 %s17, 2
        // Predicated region
        $region45: #{tpu_custom_call.1} parent=43 // pred_check
          %p1805 = pneg %p98
        $region46: #{tpu_custom_call.1} parent=43 // pred_check_branch
          %1807 = sbr.rel (%p1805) target = $region48
        $region47: #{tpu_custom_call.1} parent=43 // pred_region
          %s1808 = sand.u32 %s83, 1
          %s1809 = scalar_lea.sflag [#allocation4], %s1808
          %s1810 = sand.u32 %s83, 1
          %s1811 = smul.addr %s1810, 3088
          %s1812 = scalar_lea.vmem [#allocation7], %s1811
          %1813 = dma.done %s1809, 49408
        $region48: #{tpu_custom_call.1} parent=43 // pred_fallthru
          _
      $region44: #{tpu_custom_call.1} parent=5 // pred_fallthru
        _
    $region6: #{tpu_custom_call.1} parent=1 // loop_footer
      %s21 = sadd.s32 1, %s17
    $region7: #{tpu_custom_call.1} parent=1 // loop_footer_branch
      %16 = sbr.rel target = $region3
    $region8: #{tpu_custom_call.1} parent=1 // loop_exit
      _
    %1814 = vsyncpa [#allocation3], 1
    %s1815 = scalar_lea.sflag [#allocation3], 1
    %1816 = vsyncpa %s1815, 1
    %1817 = vsyncpa [#allocation6], 1
    %s1818 = scalar_lea.sflag [#allocation6], 1
    %1819 = vsyncpa %s1818, 1
    %1820 = vsyncpa [#allocation4], 1
    %s1821 = scalar_lea.sflag [#allocation4], 1
    %1822 = vsyncpa %s1821, 1

</llo_original>
